<compile_context>
chip_gen: v7x
topology: tpu7x:2x2x1
jax: 0.10.0
libtpu: 0.0.40
codegen_flags: <defaults>
</compile_context>

<pallas_src>
import functools

import jax
import jax.numpy as jnp
from jax.experimental import pallas as pl
from jax.experimental.pallas import tpu as pltpu


MAX_TILE_ROWS = 512  # 512 rows x 128 lanes = 64K spatial elements per step


def _round_up(v, m):
    return ((v + m - 1) // m) * m


def _row_tiling(rows):
    """Pick a row-tile size. Returns (tile_rows, rows_padded)."""
    if rows <= MAX_TILE_ROWS:
        return rows, rows                      # single tile, block == full dim
    for cand in (512, 384, 256, 128, 64, 32, 16, 8):
        if rows % cand == 0:
            return cand, rows                  # even tiling, no padding
    # TODO(synk): this fallback pads the row axis (one extra copy of x).
    return MAX_TILE_ROWS, _round_up(rows, MAX_TILE_ROWS)


def _project(x_ref, proj_ref):
    """(tr, 128*C) x-block @ (128*C, 256) structured weights -> two (tr, 128)
    lane/sublane-dense raw projections (w, h) on the MXU."""
    out = jnp.dot(x_ref[...], proj_ref[...],
                  preferred_element_type=jnp.float32,
                  precision=jax.lax.Precision.HIGHEST)
    return out[:, :128], out[:, 128:]


def _wh_kernel_pointwise(proj_ref, x_ref, w_ref, h_ref, *, act):
    w_raw, h_raw = _project(x_ref, proj_ref)
    if act == "relu":
        w_ref[...] = jnp.maximum(w_raw, 0.0)
        h_ref[...] = jnp.maximum(h_raw, 0.0)
    else:  # "sigm" -> EUP transcendental path
        w_ref[...] = jax.nn.sigmoid(w_raw)
        h_ref[...] = jax.nn.sigmoid(h_raw)


def _wh_kernel_norm(proj_ref, x_ref, w_ref, h_ref,
                    wmin_ref, wmax_ref, hmin_ref, hmax_ref, *, tr, n_valid):
    # w_ref / h_ref: (rows_pad, 128) resident across the tile axis.
    # *min/*max refs: (tr, 128) VMEM vector accumulators (pure VPU updates).
    t = pl.program_id(1)
    nt = pl.num_programs(1)

    w_raw, h_raw = _project(x_ref, proj_ref)

    row_off = pl.multiple_of(t * tr, tr)
    w_ref[pl.ds(row_off, tr), :] = w_raw
    h_ref[pl.ds(row_off, tr), :] = h_raw

    @pl.when(t == 0)
    def _():
        wmin_ref[...] = jnp.full((tr, 128), jnp.inf, jnp.float32)
        wmax_ref[...] = jnp.full((tr, 128), -jnp.inf, jnp.float32)
        hmin_ref[...] = jnp.full((tr, 128), jnp.inf, jnp.float32)
        hmax_ref[...] = jnp.full((tr, 128), -jnp.inf, jnp.float32)

    @pl.when(t < nt - 1)
    def _():
        # Interior tiles contain no padding: unmasked elementwise accumulate.
        wmin_ref[...] = jnp.minimum(wmin_ref[...], w_raw)
        wmax_ref[...] = jnp.maximum(wmax_ref[...], w_raw)
        hmin_ref[...] = jnp.minimum(hmin_ref[...], h_raw)
        hmax_ref[...] = jnp.maximum(hmax_ref[...], h_raw)

    @pl.when(t == nt - 1)
    def _():
        # Only the last tile can hold padded positions: mask them, fold in,
        # do the 4 cross-lane reductions once, and normalize the slab.
        rows = jax.lax.broadcasted_iota(jnp.int32, (tr, 128), 0)
        lanes = jax.lax.broadcasted_iota(jnp.int32, (tr, 128), 1)
        gidx = (t * tr + rows) * 128 + lanes
        valid = gidx < n_valid
        w_lo = jnp.minimum(wmin_ref[...], jnp.where(valid, w_raw, jnp.inf))
        w_hi = jnp.maximum(wmax_ref[...], jnp.where(valid, w_raw, -jnp.inf))
        h_lo = jnp.minimum(hmin_ref[...], jnp.where(valid, h_raw, jnp.inf))
        h_hi = jnp.maximum(hmax_ref[...], jnp.where(valid, h_raw, -jnp.inf))
        w_min = jnp.min(w_lo)
        w_max = jnp.max(w_hi)
        h_min = jnp.min(h_lo)
        h_max = jnp.max(h_hi)
        # The PyTorch reference has no epsilon guard, so neither do we.
        w_inv = 1.0 / (w_max - w_min)
        h_inv = 1.0 / (h_max - h_min)
        w_ref[...] = (w_ref[...] - w_min) * w_inv
        h_ref[...] = (h_ref[...] - h_min) * h_inv


def _build_projection_matrix(wproj, hproj, c):
    """Structured (128*C, 256) matrix implementing de-interleave + channel
    contraction: out[:, p]     = sum_c x[128 spatial group, p, c] * wproj[c]
                 out[:, 128+p] = sum_c x[128 spatial group, p, c] * hproj[c]."""
    wp = wproj.reshape(c).astype(jnp.float32)
    hp = hproj.reshape(c).astype(jnp.float32)
    eye = jnp.eye(128, dtype=jnp.float32)
    w_mat = jnp.einsum("c,pq->pcq", wp, eye).reshape(128 * c, 128)
    h_mat = jnp.einsum("c,pq->pcq", hp, eye).reshape(128 * c, 128)
    return jnp.concatenate([w_mat, h_mat], axis=1)            # (128*C, 256)


def _vmem_limit(byte_est):
    return int(min(max(byte_est + (8 << 20), 16 << 20), 48 << 20))


def wh_forward(x, s, t, wproj, hproj, activation="norm"):
    """Pallas implementation of WHModel.forward for the concrete subclass above.

    x:     (batch, x_max, y_max, in_channels) float32 (native NHWC layout)
    s:     unused (kept for signature parity)
    t:     (batch, 2)
    wproj: (1, in_channels) float32
    hproj: (1, in_channels) float32

    Returns (weights, heuristic), each (batch, x_max, y_max) float32.
    """
    batch, x_max, y_max, in_channels = x.shape
    assert t.shape == (batch, 2), t.shape
    del s  # not used by the base class forward

    if x.dtype != jnp.float32:
        x = x.astype(jnp.float32)

    n = x_max * y_max
    n_pad = _round_up(n, 128)
    x_flat = x.reshape(batch, n, in_channels)          # metadata-only
    if n_pad != n:
        # Only a real copy when the spatial extent is not a multiple of 128.
        x_flat = jnp.pad(x_flat, ((0, 0), (0, n_pad - n), (0, 0)))
    n_rows = n_pad // 128
    kc = 128 * in_channels

    proj = _build_projection_matrix(wproj, hproj, in_channels)
    proj_spec = pl.BlockSpec((kc, 256), lambda *idx: (0, 0))
    proj_bytes = 2 * kc * 256 * 4

    if activation in ("relu", "sigm"):
        # Batch folded into the row axis: one fully parallel 1-D grid.
        rows = batch * n_rows
        tr, rows_pad = _row_tiling(rows)
        xv = x_flat.reshape(rows, kc)                  # metadata-only
        if rows_pad != rows:
            xv = jnp.pad(xv, ((0, rows_pad - rows), (0, 0)))
        n_tiles = rows_pad // tr

        kernel = functools.partial(_wh_kernel_pointwise, act=activation)
        vmem = _vmem_limit(2 * tr * kc * 4 + proj_bytes + 4 * tr * 128 * 4)

        w_flat, h_flat = pl.pallas_call(
            kernel,
            out_shape=(jax.ShapeDtypeStruct((rows_pad, 128), jnp.float32),
                       jax.ShapeDtypeStruct((rows_pad, 128), jnp.float32)),
            grid_spec=pltpu.PrefetchScalarGridSpec(
                num_scalar_prefetch=0,
                grid=(n_tiles,),
                in_specs=[proj_spec,
                          pl.BlockSpec((tr, kc), lambda r: (r, 0))],
                out_specs=[pl.BlockSpec((tr, 128), lambda r: (r, 0)),
                           pl.BlockSpec((tr, 128), lambda r: (r, 0))],
            ),
            compiler_params=pltpu.CompilerParams(
                dimension_semantics=("parallel",),
                vmem_limit_bytes=vmem,
            ),
        )(proj, xv)

        w = w_flat[:rows].reshape(batch, n_pad)[:, :n].reshape(batch, x_max, y_max)
        h = h_flat[:rows].reshape(batch, n_pad)[:, :n].reshape(batch, x_max, y_max)

    elif activation == "norm":
        # Per-batch grid; resident output slab across the (arbitrary) tile axis
        # so the global min/max normalization runs in the same pass over x.
        tr, rows_pad = _row_tiling(n_rows)
        xv = x_flat.reshape(batch, n_rows, kc)         # metadata-only
        if rows_pad != n_rows:
            xv = jnp.pad(xv, ((0, 0), (0, rows_pad - n_rows), (0, 0)))
        n_tiles = rows_pad // tr

        kernel = functools.partial(_wh_kernel_norm, tr=tr, n_valid=n)
        vmem = _vmem_limit(2 * tr * kc * 4 + proj_bytes
                           + 4 * rows_pad * 128 * 4    # 2 resident slabs (x2)
                           + 4 * tr * 128 * 4)         # min/max accumulators

        w_flat, h_flat = pl.pallas_call(
            kernel,
            out_shape=(jax.ShapeDtypeStruct((batch, rows_pad, 128), jnp.float32),
                       jax.ShapeDtypeStruct((batch, rows_pad, 128), jnp.float32)),
            grid_spec=pltpu.PrefetchScalarGridSpec(
                num_scalar_prefetch=0,
                grid=(batch, n_tiles),
                in_specs=[proj_spec,
                          pl.BlockSpec((pl.Squeezed(), tr, kc),
                                       lambda b, r: (b, r, 0))],
                out_specs=[pl.BlockSpec((pl.Squeezed(), rows_pad, 128),
                                        lambda b, r: (b, 0, 0)),
                           pl.BlockSpec((pl.Squeezed(), rows_pad, 128),
                                        lambda b, r: (b, 0, 0))],
                scratch_shapes=[pltpu.VMEM((tr, 128), jnp.float32),
                                pltpu.VMEM((tr, 128), jnp.float32),
                                pltpu.VMEM((tr, 128), jnp.float32),
                                pltpu.VMEM((tr, 128), jnp.float32)],
            ),
            compiler_params=pltpu.CompilerParams(
                dimension_semantics=("parallel", "arbitrary"),
                vmem_limit_bytes=vmem,
            ),
        )(proj, xv)

        w = w_flat.reshape(batch, rows_pad * 128)[:, :n].reshape(batch, x_max, y_max)
        h = h_flat.reshape(batch, rows_pad * 128)[:, :n].reshape(batch, x_max, y_max)

    else:
        raise NotImplementedError(
            "Activation " + str(activation) + " not implemented.")

    # forward() shape assertions from the reference module
    assert w.shape[0] == batch, w.shape[0]
    assert (batch, x_max, y_max) == h.shape, h.shape
    return w, h


def _reference(x, wproj, hproj, activation):
    # Exact f32 reference (elementwise multiply + sum, no MXU).
    wp = wproj.reshape(-1)
    hp = hproj.reshape(-1)
    w_raw = jnp.sum(x * wp[None, None, None, :], axis=-1)
    h_raw = jnp.sum(x * hp[None, None, None, :], axis=-1)

    def act(a):
        if activation == "relu":
            return jnp.maximum(a, 0.0)
        if activation == "sigm":
            return jax.nn.sigmoid(a)
        if activation == "norm":
            mn = jnp.min(a, axis=(1, 2), keepdims=True)
            mx = jnp.max(a, axis=(1, 2), keepdims=True)
            return (a - mn) / (mx - mn)
        raise NotImplementedError

    return act(w_raw), act(h_raw)


if __name__ == "__main__":
    key = jax.random.PRNGKey(0)
    kx, kt, ks = jax.random.split(key, 3)

    batch, x_max, y_max, in_channels = 2, 32, 32, 4
    x = jax.random.normal(kx, (batch, x_max, y_max, in_channels),
                          dtype=jnp.float32)
    t = jax.random.normal(kt, (batch, 2), dtype=jnp.float32)
    s = jax.random.normal(ks, (batch,), dtype=jnp.float32)

    # Deterministic "parameters" for the concrete extract_wh projection.
    wproj = (jnp.arange(in_channels, dtype=jnp.float32) + 1.0
             ).reshape(1, in_channels) / in_channels
    hproj = (jnp.arange(in_channels, dtype=jnp.float32) * -0.5 + 1.0
             ).reshape(1, in_channels)

    ok = True
    for act_name in ("relu", "sigm", "norm"):
        w, h = wh_forward(x, s, t, wproj, hproj, activation=act_name)
        jax.block_until_ready((w, h))
        w_ref, h_ref = _reference(x, wproj, hproj, act_name)
        ok &= bool(jnp.allclose(w, w_ref, atol=1e-5, rtol=1e-5))
        ok &= bool(jnp.allclose(h, h_ref, atol=1e-5, rtol=1e-5))

    if ok:
        print("KERNEL_OK")
    else:
        print("KERNEL_MISMATCH")
</pallas_src>

<mosaic_0001>
module attributes {stable_mosaic.version = 11 : i64} {
  func.func @_wh_kernel_pointwise(%arg0: i32, %arg1: memref<512x256xf32, #tpu.memory_space<vmem>>, %arg2: memref<16x512xf32, #tpu.memory_space<vmem>>, %arg3: memref<16x128xf32, #tpu.memory_space<vmem>>, %arg4: memref<16x128xf32, #tpu.memory_space<vmem>>) attributes {dimension_semantics = [#tpu.dimension_semantics<parallel>], iteration_bounds = array<i64: 1>, scalar_prefetch = 0 : i64, scratch_operands = 0 : i64, tpu.core_type = #tpu.core_type<tc>, window_params = [{pipeline_mode = #tpu.pipeline_mode<synchronous>, transform_indices = @transform_0, window_bounds = array<i64: 512, 256>}, {transform_indices = @transform_1, window_bounds = array<i64: 16, 512>}, {transform_indices = @transform_2, window_bounds = array<i64: 16, 128>}, {transform_indices = @transform_3, window_bounds = array<i64: 16, 128>}]} {
    %c0 = arith.constant 0 : index
    %c0_0 = arith.constant 0 : index
    %0 = vector.load %arg2[%c0, %c0_0] : memref<16x512xf32, #tpu.memory_space<vmem>>, vector<16x512xf32>
    %c0_1 = arith.constant 0 : index
    %c0_2 = arith.constant 0 : index
    %1 = vector.load %arg1[%c0_1, %c0_2] : memref<512x256xf32, #tpu.memory_space<vmem>>, vector<512x256xf32>
    %cst = arith.constant dense<0.000000e+00> : vector<16x256xf32>
    %2 = tpu.matmul %0, %1, %cst {dimension_numbers = #tpu.dot_dimension_numbers<[1], [0], [0], [1], [0, 0, 1, 1], [], []>, precision = #tpu.contract_precision<fp32>} : vector<16x512xf32>, vector<512x256xf32>, vector<16x256xf32> -> vector<16x256xf32>
    %3 = vector.extract_strided_slice %2 {offsets = [0, 0], sizes = [16, 128], strides = [1, 1]} : vector<16x256xf32> to vector<16x128xf32>
    %4 = vector.extract_strided_slice %2 {offsets = [0, 128], sizes = [16, 128], strides = [1, 1]} : vector<16x256xf32> to vector<16x128xf32>
    %cst_3 = arith.constant 0.000000e+00 : f32
    %5 = vector.broadcast %cst_3 : f32 to vector<16x128xf32>
    %6 = arith.maximumf %3, %5 : vector<16x128xf32>
    %c0_4 = arith.constant 0 : index
    %c0_5 = arith.constant 0 : index
    %7 = vector.load %arg3[%c0_4, %c0_5] : memref<16x128xf32, #tpu.memory_space<vmem>>, vector<16x128xf32>
    tpu.vector_store %arg3[%c0_4, %c0_5], %6 {strides = array<i32>} : memref<16x128xf32, #tpu.memory_space<vmem>>, vector<16x128xf32>,
    %cst_6 = arith.constant 0.000000e+00 : f32
    %8 = vector.broadcast %cst_6 : f32 to vector<16x128xf32>
    %9 = arith.maximumf %4, %8 : vector<16x128xf32>
    %c0_7 = arith.constant 0 : index
    %c0_8 = arith.constant 0 : index
    %10 = vector.load %arg4[%c0_7, %c0_8] : memref<16x128xf32, #tpu.memory_space<vmem>>, vector<16x128xf32>
    tpu.vector_store %arg4[%c0_7, %c0_8], %9 {strides = array<i32>} : memref<16x128xf32, #tpu.memory_space<vmem>>, vector<16x128xf32>,
    return
  }
  func.func @transform_0(%arg0: i32) -> (i32, i32) {
    %c0_i32 = arith.constant 0 : i32
    %c0_i32_0 = arith.constant 0 : i32
    %c0_i32_1 = arith.constant 0 : i32
    return %c0_i32, %c0_i32_0 : i32, i32
  }
  func.func @transform_1(%arg0: i32) -> (i32, i32) {
    %c0_i32 = arith.constant 0 : i32
    %c0_i32_0 = arith.constant 0 : i32
    return %arg0, %c0_i32 : i32, i32
  }
  func.func @transform_2(%arg0: i32) -> (i32, i32) {
    %c0_i32 = arith.constant 0 : i32
    %c0_i32_0 = arith.constant 0 : i32
    return %arg0, %c0_i32 : i32, i32
  }
  func.func @transform_3(%arg0: i32) -> (i32, i32) {
    %c0_i32 = arith.constant 0 : i32
    %c0_i32_0 = arith.constant 0 : i32
    return %arg0, %c0_i32 : i32, i32
  }
}

</mosaic_0001>

<llo_original>
// kernel: tpu_custom_call.1
$region0: #{tpu_custom_call.1}
  #allocation0 [shape = 'u32[]', space=smem, size = 0x4, offset = 0x4, fixed_abs, tag = 'smem constant byte address 0x4 - core index']
  #allocation1 [shape = 'u32[144,128]{1,0:T(1,128)}', space=vmem, size = 0x12000, scoped, tag = 'internal scratch']
  %s0 = inlined_call_operand.hbm [shape: f32[512,256], index: 0, kind: input, shape index: {}]
  %s1 = inlined_call_operand.hbm [shape: f32[16,512], index: 1, kind: input, shape index: {}]
  %s2 = inlined_call_operand.hbm [shape: f32[16,128], index: 2, kind: output, shape index: {0}]
  %s3 = inlined_call_operand.hbm [shape: f32[16,128], index: 3, kind: output, shape index: {1}]
  %4 = xla_tuple %s2, %s3
  %s5 = sld [smem:[#allocation0]]
  $region34: #{tpu_custom_call.1} parent=0
    _
  %s7 = ssub.s32 1, %s5
  %s8 = scalar_select 0, %s7, %s5
  $region1: #{tpu_custom_call.1} parent=0
    #allocation2 [shape = 'u8[524288]{0}', space=vmem, size = 0x80000, scoped, tag = 'input window, operand 0, single buffered']
    #allocation3 [shape = 's32[1]{0}', space=sflag, size = 0x4, scoped, tag = 'scoped memory for tpu_custom_call.1']
    #allocation4 [shape = 's32[1]{0}', space=sflag, size = 0x4, scoped, tag = 'scoped memory for tpu_custom_call.1']
    #allocation5 [shape = 'u8[32768]{0}', space=vmem, size = 0x8000, scoped, tag = 'input window, operand 1, single buffered']
    #allocation6 [shape = 's32[1]{0}', space=sflag, size = 0x4, scoped, tag = 'scoped memory for tpu_custom_call.1']
    #allocation7 [shape = 'u8[8192]{0}', space=vmem, size = 0x2000, scoped, tag = 'output window, operand 0, single buffered']
    #allocation8 [shape = 'u8[8192]{0}', space=vmem, size = 0x2000, scoped, tag = 'output window, operand 1, single buffered']
    #allocation9 [shape = 's32[1]{0}', space=sflag, size = 0x4, scoped, tag = 'scoped memory for tpu_custom_call.1']
    %9 = vsyncpa [#allocation3], 0
    %10 = vsyncpa [#allocation6], 0
    %11 = vsyncpa [#allocation4], 0
    %12 = vsyncpa [#allocation9], 0
    // Predicated region
    $region2: #{tpu_custom_call.1} parent=1 // pred_check
      _
    $region3: #{tpu_custom_call.1} parent=1 // pred_check_branch
      %14 = sbr.rel (0) target = $region5
    $region4: #{tpu_custom_call.1} parent=1 // pred_region
      %s16 = ssub.s32 16384, 16384
      %17 = vsyncadd [#allocation3], %s16
      %s18 = sshll.u32 [#allocation2], 4
      %s19 = int_to_ptr.vmem [resolvable:$true] %s18
      %24 = dma.hbm_to_vmem [thread:$0]  %s0, 16384, %s19, [#allocation3], 256, 256, 16
    $region5: #{tpu_custom_call.1} parent=1 // pred_fallthru
      _
    // Predicated region
    $region6: #{tpu_custom_call.1} parent=1 // pred_check
      _
    $region7: #{tpu_custom_call.1} parent=1 // pred_check_branch
      %26 = sbr.rel (0) target = $region9
    $region8: #{tpu_custom_call.1} parent=1 // pred_region
      %s28 = ssub.s32 1024, 1024
      %29 = vsyncadd [#allocation6], %s28
      %s30 = sshll.u32 [#allocation5], 4
      %s31 = int_to_ptr.vmem [resolvable:$true] %s30
      %36 = dma.hbm_to_vmem [thread:$0]  %s1, 1024, %s31, [#allocation6], 512, 512, 32
    $region9: #{tpu_custom_call.1} parent=1 // pred_fallthru
      _
    // Predicated region
    $region10: #{tpu_custom_call.1} parent=1 // pred_check
      _
    $region11: #{tpu_custom_call.1} parent=1 // pred_check_branch
      %38 = sbr.rel (0) target = $region13
    $region12: #{tpu_custom_call.1} parent=1 // pred_region
      %39 = dma.done [#allocation3], 16384
    $region13: #{tpu_custom_call.1} parent=1 // pred_fallthru
      _
    // Predicated region
    $region14: #{tpu_custom_call.1} parent=1 // pred_check
      _
    $region15: #{tpu_custom_call.1} parent=1 // pred_check_branch
      %41 = sbr.rel (0) target = $region17
    $region16: #{tpu_custom_call.1} parent=1 // pred_region
      %42 = dma.done [#allocation6], 1024
    $region17: #{tpu_custom_call.1} parent=1 // pred_fallthru
      _
    %v43 = vld [vmem:[#allocation5] sm:$0xff]
    %v44 = vld [vmem:[#allocation5 + $0x8] sm:$0xff]
    %v45 = vld [vmem:[#allocation5 + $0x10] sm:$0xff]
    %v46 = vld [vmem:[#allocation5 + $0x18] sm:$0xff]
    %v47 = vld [vmem:[#allocation5 + $0x20] sm:$0xff]
    %v48 = vld [vmem:[#allocation5 + $0x28] sm:$0xff]
    %v49 = vld [vmem:[#allocation5 + $0x30] sm:$0xff]
    %v50 = vld [vmem:[#allocation5 + $0x38] sm:$0xff]
    %v51 = vld [vmem:[#allocation2] sm:$0xff]
    %v52 = vld [vmem:[#allocation2 + $0x8] sm:$0xff]
    %v53 = vld [vmem:[#allocation2 + $0x10] sm:$0xff]
    %v54 = vld [vmem:[#allocation2 + $0x18] sm:$0xff]
    %v55 = vld [vmem:[#allocation2 + $0x20] sm:$0xff]
    %v56 = vld [vmem:[#allocation2 + $0x28] sm:$0xff]
    %v57 = vld [vmem:[#allocation2 + $0x30] sm:$0xff]
    %v58 = vld [vmem:[#allocation2 + $0x38] sm:$0xff]
    %v59 = vld [vmem:[#allocation2 + $0x40] sm:$0xff]
    %v60 = vld [vmem:[#allocation2 + $0x48] sm:$0xff]
    %v61 = vld [vmem:[#allocation2 + $0x50] sm:$0xff]
    %v62 = vld [vmem:[#allocation2 + $0x58] sm:$0xff]
    %v63 = vld [vmem:[#allocation2 + $0x60] sm:$0xff]
    %v64 = vld [vmem:[#allocation2 + $0x68] sm:$0xff]
    %v65 = vld [vmem:[#allocation2 + $0x70] sm:$0xff]
    %v66 = vld [vmem:[#allocation2 + $0x78] sm:$0xff]
    %v67 = vld [vmem:[#allocation2 + $0x80] sm:$0xff]
    %v68 = vld [vmem:[#allocation2 + $0x88] sm:$0xff]
    %v69 = vld [vmem:[#allocation2 + $0x90] sm:$0xff]
    %v70 = vld [vmem:[#allocation2 + $0x98] sm:$0xff]
    %v71 = vld [vmem:[#allocation2 + $0xa0] sm:$0xff]
    %v72 = vld [vmem:[#allocation2 + $0xa8] sm:$0xff]
    %v73 = vld [vmem:[#allocation2 + $0xb0] sm:$0xff]
    %v74 = vld [vmem:[#allocation2 + $0xb8] sm:$0xff]
    %v75 = vld [vmem:[#allocation2 + $0xc0] sm:$0xff]
    %v76 = vld [vmem:[#allocation2 + $0xc8] sm:$0xff]
    %v77 = vld [vmem:[#allocation2 + $0xd0] sm:$0xff]
    %v78 = vld [vmem:[#allocation2 + $0xd8] sm:$0xff]
    %v79 = vld [vmem:[#allocation2 + $0xe0] sm:$0xff]
    %v80 = vld [vmem:[#allocation2 + $0xe8] sm:$0xff]
    %v81 = vld [vmem:[#allocation2 + $0xf0] sm:$0xff]
    %v82 = vld [vmem:[#allocation2 + $0xf8] sm:$0xff]
    %v83 = vld [vmem:[#allocation2 + $0x100] sm:$0xff]
    %v84 = vld [vmem:[#allocation2 + $0x108] sm:$0xff]
    %v85 = vld [vmem:[#allocation2 + $0x110] sm:$0xff]
    %v86 = vld [vmem:[#allocation2 + $0x118] sm:$0xff]
    %v87 = vld [vmem:[#allocation2 + $0x120] sm:$0xff]
    %v88 = vld [vmem:[#allocation2 + $0x128] sm:$0xff]
    %v89 = vld [vmem:[#allocation2 + $0x130] sm:$0xff]
    %v90 = vld [vmem:[#allocation2 + $0x138] sm:$0xff]
    %v91 = vld [vmem:[#allocation2 + $0x140] sm:$0xff]
    %v92 = vld [vmem:[#allocation2 + $0x148] sm:$0xff]
    %v93 = vld [vmem:[#allocation2 + $0x150] sm:$0xff]
    %v94 = vld [vmem:[#allocation2 + $0x158] sm:$0xff]
    %v95 = vld [vmem:[#allocation2 + $0x160] sm:$0xff]
    %v96 = vld [vmem:[#allocation2 + $0x168] sm:$0xff]
    %v97 = vld [vmem:[#allocation2 + $0x170] sm:$0xff]
    %v98 = vld [vmem:[#allocation2 + $0x178] sm:$0xff]
    %v99 = vld [vmem:[#allocation2 + $0x180] sm:$0xff]
    %v100 = vld [vmem:[#allocation2 + $0x188] sm:$0xff]
    %v101 = vld [vmem:[#allocation2 + $0x190] sm:$0xff]
    %v102 = vld [vmem:[#allocation2 + $0x198] sm:$0xff]
    %v103 = vld [vmem:[#allocation2 + $0x1a0] sm:$0xff]
    %v104 = vld [vmem:[#allocation2 + $0x1a8] sm:$0xff]
    %v105 = vld [vmem:[#allocation2 + $0x1b0] sm:$0xff]
    %v106 = vld [vmem:[#allocation2 + $0x1b8] sm:$0xff]
    %v107 = vld [vmem:[#allocation2 + $0x1c0] sm:$0xff]
    %v108 = vld [vmem:[#allocation2 + $0x1c8] sm:$0xff]
    %v109 = vld [vmem:[#allocation2 + $0x1d0] sm:$0xff]
    %v110 = vld [vmem:[#allocation2 + $0x1d8] sm:$0xff]
    %v111 = vld [vmem:[#allocation2 + $0x1e0] sm:$0xff]
    %v112 = vld [vmem:[#allocation2 + $0x1e8] sm:$0xff]
    %v113 = vld [vmem:[#allocation2 + $0x1f0] sm:$0xff]
    %v114 = vld [vmem:[#allocation2 + $0x1f8] sm:$0xff]
    %v115 = vld [vmem:[#allocation2 + $0x200] sm:$0xff]
    %v116 = vld [vmem:[#allocation2 + $0x208] sm:$0xff]
    %v117 = vld [vmem:[#allocation2 + $0x210] sm:$0xff]
    %v118 = vld [vmem:[#allocation2 + $0x218] sm:$0xff]
    %v119 = vld [vmem:[#allocation2 + $0x220] sm:$0xff]
    %v120 = vld [vmem:[#allocation2 + $0x228] sm:$0xff]
    %v121 = vld [vmem:[#allocation2 + $0x230] sm:$0xff]
    %v122 = vld [vmem:[#allocation2 + $0x238] sm:$0xff]
    %v123 = vld [vmem:[#allocation2 + $0x240] sm:$0xff]
    %v124 = vld [vmem:[#allocation2 + $0x248] sm:$0xff]
    %v125 = vld [vmem:[#allocation2 + $0x250] sm:$0xff]
    %v126 = vld [vmem:[#allocation2 + $0x258] sm:$0xff]
    %v127 = vld [vmem:[#allocation2 + $0x260] sm:$0xff]
    %v128 = vld [vmem:[#allocation2 + $0x268] sm:$0xff]
    %v129 = vld [vmem:[#allocation2 + $0x270] sm:$0xff]
    %v130 = vld [vmem:[#allocation2 + $0x278] sm:$0xff]
    %v131 = vld [vmem:[#allocation2 + $0x280] sm:$0xff]
    %v132 = vld [vmem:[#allocation2 + $0x288] sm:$0xff]
    %v133 = vld [vmem:[#allocation2 + $0x290] sm:$0xff]
    %v134 = vld [vmem:[#allocation2 + $0x298] sm:$0xff]
    %v135 = vld [vmem:[#allocation2 + $0x2a0] sm:$0xff]
    %v136 = vld [vmem:[#allocation2 + $0x2a8] sm:$0xff]
    %v137 = vld [vmem:[#allocation2 + $0x2b0] sm:$0xff]
    %v138 = vld [vmem:[#allocation2 + $0x2b8] sm:$0xff]
    %v139 = vld [vmem:[#allocation2 + $0x2c0] sm:$0xff]
    %v140 = vld [vmem:[#allocation2 + $0x2c8] sm:$0xff]
    %v141 = vld [vmem:[#allocation2 + $0x2d0] sm:$0xff]
    %v142 = vld [vmem:[#allocation2 + $0x2d8] sm:$0xff]
    %v143 = vld [vmem:[#allocation2 + $0x2e0] sm:$0xff]
    %v144 = vld [vmem:[#allocation2 + $0x2e8] sm:$0xff]
    %v145 = vld [vmem:[#allocation2 + $0x2f0] sm:$0xff]
    %v146 = vld [vmem:[#allocation2 + $0x2f8] sm:$0xff]
    %v147 = vld [vmem:[#allocation2 + $0x300] sm:$0xff]
    %v148 = vld [vmem:[#allocation2 + $0x308] sm:$0xff]
    %v149 = vld [vmem:[#allocation2 + $0x310] sm:$0xff]
    %v150 = vld [vmem:[#allocation2 + $0x318] sm:$0xff]
    %v151 = vld [vmem:[#allocation2 + $0x320] sm:$0xff]
    %v152 = vld [vmem:[#allocation2 + $0x328] sm:$0xff]
    %v153 = vld [vmem:[#allocation2 + $0x330] sm:$0xff]
    %v154 = vld [vmem:[#allocation2 + $0x338] sm:$0xff]
    %v155 = vld [vmem:[#allocation2 + $0x340] sm:$0xff]
    %v156 = vld [vmem:[#allocation2 + $0x348] sm:$0xff]
    %v157 = vld [vmem:[#allocation2 + $0x350] sm:$0xff]
    %v158 = vld [vmem:[#allocation2 + $0x358] sm:$0xff]
    %v159 = vld [vmem:[#allocation2 + $0x360] sm:$0xff]
    %v160 = vld [vmem:[#allocation2 + $0x368] sm:$0xff]
    %v161 = vld [vmem:[#allocation2 + $0x370] sm:$0xff]
    %v162 = vld [vmem:[#allocation2 + $0x378] sm:$0xff]
    %v163 = vld [vmem:[#allocation2 + $0x380] sm:$0xff]
    %v164 = vld [vmem:[#allocation2 + $0x388] sm:$0xff]
    %v165 = vld [vmem:[#allocation2 + $0x390] sm:$0xff]
    %v166 = vld [vmem:[#allocation2 + $0x398] sm:$0xff]
    %v167 = vld [vmem:[#allocation2 + $0x3a0] sm:$0xff]
    %v168 = vld [vmem:[#allocation2 + $0x3a8] sm:$0xff]
    %v169 = vld [vmem:[#allocation2 + $0x3b0] sm:$0xff]
    %v170 = vld [vmem:[#allocation2 + $0x3b8] sm:$0xff]
    %v171 = vld [vmem:[#allocation2 + $0x3c0] sm:$0xff]
    %v172 = vld [vmem:[#allocation2 + $0x3c8] sm:$0xff]
    %v173 = vld [vmem:[#allocation2 + $0x3d0] sm:$0xff]
    %v174 = vld [vmem:[#allocation2 + $0x3d8] sm:$0xff]
    %v175 = vld [vmem:[#allocation2 + $0x3e0] sm:$0xff]
    %v176 = vld [vmem:[#allocation2 + $0x3e8] sm:$0xff]
    %v177 = vld [vmem:[#allocation2 + $0x3f0] sm:$0xff]
    %v178 = vld [vmem:[#allocation2 + $0x3f8] sm:$0xff]
    %v179 = vand.u32 %v52, 4294901760
    %180 = vmatprep.subr.mxu0 %v179
    %v181 = vand.u32 %v51, 4294901760
    %182 = vmatpush1.msra.mxu0 %v181
    %v183 = vand.u32 %v54, 4294901760
    %184 = vmatprep.subr.mxu0 %v183
    %v185 = vand.u32 %v53, 4294901760
    %186 = vmatpush1.msra.mxu0 %v185
    %v187 = vand.u32 %v56, 4294901760
    %188 = vmatprep.subr.mxu0 %v187
    %v189 = vand.u32 %v55, 4294901760
    %190 = vmatpush1.msra.mxu0 %v189
    %v191 = vand.u32 %v58, 4294901760
    %192 = vmatprep.subr.mxu0 %v191
    %v193 = vand.u32 %v57, 4294901760
    %194 = vmatpush1.msra.mxu0 %v193
    %v195 = vand.u32 %v60, 4294901760
    %196 = vmatprep.subr.mxu0 %v195
    %v197 = vand.u32 %v59, 4294901760
    %198 = vmatpush1.msra.mxu0 %v197
    %v199 = vand.u32 %v62, 4294901760
    %200 = vmatprep.subr.mxu0 %v199
    %v201 = vand.u32 %v61, 4294901760
    %202 = vmatpush1.msra.mxu0 %v201
    %v203 = vand.u32 %v64, 4294901760
    %204 = vmatprep.subr.mxu0 %v203
    %v205 = vand.u32 %v63, 4294901760
    %206 = vmatpush1.msra.mxu0 %v205
    %v207 = vand.u32 %v66, 4294901760
    %208 = vmatprep.subr.mxu0 %v207
    %v209 = vand.u32 %v65, 4294901760
    %210 = vmatpush1.msra.mxu0 %v209
    %v211 = vand.u32 %v68, 4294901760
    %212 = vmatprep.subr.mxu0 %v211
    %v213 = vand.u32 %v67, 4294901760
    %214 = vmatpush1.msra.mxu0 %v213
    %v215 = vand.u32 %v70, 4294901760
    %216 = vmatprep.subr.mxu0 %v215
    %v217 = vand.u32 %v69, 4294901760
    %218 = vmatpush1.msra.mxu0 %v217
    %v219 = vand.u32 %v72, 4294901760
    %220 = vmatprep.subr.mxu0 %v219
    %v221 = vand.u32 %v71, 4294901760
    %222 = vmatpush1.msra.mxu0 %v221
    %v223 = vand.u32 %v74, 4294901760
    %224 = vmatprep.subr.mxu0 %v223
    %v225 = vand.u32 %v73, 4294901760
    %226 = vmatpush1.msra.mxu0 %v225
    %v227 = vand.u32 %v76, 4294901760
    %228 = vmatprep.subr.mxu0 %v227
    %v229 = vand.u32 %v75, 4294901760
    %230 = vmatpush1.msra.mxu0 %v229
    %v231 = vand.u32 %v78, 4294901760
    %232 = vmatprep.subr.mxu0 %v231
    %v233 = vand.u32 %v77, 4294901760
    %234 = vmatpush1.msra.mxu0 %v233
    %v235 = vand.u32 %v80, 4294901760
    %236 = vmatprep.subr.mxu0 %v235
    %v237 = vand.u32 %v79, 4294901760
    %238 = vmatpush1.msra.mxu0 %v237
    %v239 = vand.u32 %v82, 4294901760
    %240 = vmatprep.subr.mxu0 %v239
    %v241 = vand.u32 %v81, 4294901760
    %242 = vmatpush1.msra.mxu0 %v241
    %v243 = vand.u32 %v84, 4294901760
    %244 = vmatprep.subr.mxu0 %v243
    %v245 = vand.u32 %v83, 4294901760
    %246 = vmatpush1.msra.mxu0 %v245
    %v247 = vand.u32 %v86, 4294901760
    %248 = vmatprep.subr.mxu0 %v247
    %v249 = vand.u32 %v85, 4294901760
    %250 = vmatpush1.msra.mxu0 %v249
    %v251 = vand.u32 %v88, 4294901760
    %252 = vmatprep.subr.mxu0 %v251
    %v253 = vand.u32 %v87, 4294901760
    %254 = vmatpush1.msra.mxu0 %v253
    %v255 = vand.u32 %v90, 4294901760
    %256 = vmatprep.subr.mxu0 %v255
    %v257 = vand.u32 %v89, 4294901760
    %258 = vmatpush1.msra.mxu0 %v257
    %v259 = vand.u32 %v92, 4294901760
    %260 = vmatprep.subr.mxu0 %v259
    %v261 = vand.u32 %v91, 4294901760
    %262 = vmatpush1.msra.mxu0 %v261
    %v263 = vand.u32 %v94, 4294901760
    %264 = vmatprep.subr.mxu0 %v263
    %v265 = vand.u32 %v93, 4294901760
    %266 = vmatpush1.msra.mxu0 %v265
    %v267 = vand.u32 %v96, 4294901760
    %268 = vmatprep.subr.mxu0 %v267
    %v269 = vand.u32 %v95, 4294901760
    %270 = vmatpush1.msra.mxu0 %v269
    %v271 = vand.u32 %v98, 4294901760
    %272 = vmatprep.subr.mxu0 %v271
    %v273 = vand.u32 %v97, 4294901760
    %274 = vmatpush1.msra.mxu0 %v273
    %v275 = vand.u32 %v100, 4294901760
    %276 = vmatprep.subr.mxu0 %v275
    %v277 = vand.u32 %v99, 4294901760
    %278 = vmatpush1.msra.mxu0 %v277
    %v279 = vand.u32 %v102, 4294901760
    %280 = vmatprep.subr.mxu0 %v279
    %v281 = vand.u32 %v101, 4294901760
    %282 = vmatpush1.msra.mxu0 %v281
    %v283 = vand.u32 %v104, 4294901760
    %284 = vmatprep.subr.mxu0 %v283
    %v285 = vand.u32 %v103, 4294901760
    %286 = vmatpush1.msra.mxu0 %v285
    %v287 = vand.u32 %v106, 4294901760
    %288 = vmatprep.subr.mxu0 %v287
    %v289 = vand.u32 %v105, 4294901760
    %290 = vmatpush1.msra.mxu0 %v289
    %v291 = vand.u32 %v108, 4294901760
    %292 = vmatprep.subr.mxu0 %v291
    %v293 = vand.u32 %v107, 4294901760
    %294 = vmatpush1.msra.mxu0 %v293
    %v295 = vand.u32 %v110, 4294901760
    %296 = vmatprep.subr.mxu0 %v295
    %v297 = vand.u32 %v109, 4294901760
    %298 = vmatpush1.msra.mxu0 %v297
    %v299 = vand.u32 %v112, 4294901760
    %300 = vmatprep.subr.mxu0 %v299
    %v301 = vand.u32 %v111, 4294901760
    %302 = vmatpush1.msra.mxu0 %v301
    %v303 = vand.u32 %v114, 4294901760
    %304 = vmatprep.subr.mxu0 %v303
    %v305 = vand.u32 %v113, 4294901760
    %306 = vmatpush1.msra.mxu0 %v305
    %v307 = vand.u32 %v44, 4294901760
    %v308 = vsub.f32 %v44, %v307
    %v309 = vand.u32 %v308, 4294901760
    %v310 = vsub.f32 %v308, %v309
    %v311 = vand.u32 %v310, 4294901760
    %312 = vmatprep.mubr.f32.mxu0 %v311
    %v313 = vand.u32 %v43, 4294901760
    %v314 = vsub.f32 %v43, %v313
    %v315 = vand.u32 %v314, 4294901760
    %v316 = vsub.f32 %v314, %v315
    %v317 = vand.u32 %v316, 4294901760
    %318 = vmatmul.mubr.f32.gmra.mrb[0].mxu0 %v317
    %v319 = vpop.f32.mrb[0].mxu0
    %v320 = vadd.f32 0.0, %v319
    %v321 = vpop.f32.mrb[0].mxu0
    %v322 = vadd.f32 0.0, %v321
    %v323 = vand.u32 %v48, 4294901760
    %v324 = vsub.f32 %v48, %v323
    %v325 = vand.u32 %v324, 4294901760
    %v326 = vsub.f32 %v324, %v325
    %v327 = vand.u32 %v326, 4294901760
    %328 = vmatprep.mubr.f32.mxu0 %v327
    %v329 = vand.u32 %v47, 4294901760
    %v330 = vsub.f32 %v47, %v329
    %v331 = vand.u32 %v330, 4294901760
    %v332 = vsub.f32 %v330, %v331
    %v333 = vand.u32 %v332, 4294901760
    %334 = vmatmul.mubr.f32.gmra.mrb[0].mxu0 %v333
    %v335 = vpop.f32.mrb[0].mxu0
    %v336 = vadd.f32 0.0, %v335
    %v337 = vpop.f32.mrb[0].mxu0
    %v338 = vadd.f32 0.0, %v337
    %339 = vdwg.mxu0
    %v340 = vand.u32 %v52, 4294901760
    %v341 = vsub.f32 %v52, %v340
    %v342 = vand.u32 %v341, 4294901760
    %v343 = vsub.f32 %v341, %v342
    %v344 = vand.u32 %v343, 4294901760
    %345 = vmatprep.subr.mxu0 %v344
    %v346 = vand.u32 %v51, 4294901760
    %v347 = vsub.f32 %v51, %v346
    %v348 = vand.u32 %v347, 4294901760
    %v349 = vsub.f32 %v347, %v348
    %v350 = vand.u32 %v349, 4294901760
    %351 = vmatpush1.msra.mxu0 %v350
    %v352 = vand.u32 %v54, 4294901760
    %v353 = vsub.f32 %v54, %v352
    %v354 = vand.u32 %v353, 4294901760
    %v355 = vsub.f32 %v353, %v354
    %v356 = vand.u32 %v355, 4294901760
    %357 = vmatprep.subr.mxu0 %v356
    %v358 = vand.u32 %v53, 4294901760
    %v359 = vsub.f32 %v53, %v358
    %v360 = vand.u32 %v359, 4294901760
    %v361 = vsub.f32 %v359, %v360
    %v362 = vand.u32 %v361, 4294901760
    %363 = vmatpush1.msra.mxu0 %v362
    %v364 = vand.u32 %v56, 4294901760
    %v365 = vsub.f32 %v56, %v364
    %v366 = vand.u32 %v365, 4294901760
    %v367 = vsub.f32 %v365, %v366
    %v368 = vand.u32 %v367, 4294901760
    %369 = vmatprep.subr.mxu0 %v368
    %v370 = vand.u32 %v55, 4294901760
    %v371 = vsub.f32 %v55, %v370
    %v372 = vand.u32 %v371, 4294901760
    %v373 = vsub.f32 %v371, %v372
    %v374 = vand.u32 %v373, 4294901760
    %375 = vmatpush1.msra.mxu0 %v374
    %v376 = vand.u32 %v58, 4294901760
    %v377 = vsub.f32 %v58, %v376
    %v378 = vand.u32 %v377, 4294901760
    %v379 = vsub.f32 %v377, %v378
    %v380 = vand.u32 %v379, 4294901760
    %381 = vmatprep.subr.mxu0 %v380
    %v382 = vand.u32 %v57, 4294901760
    %v383 = vsub.f32 %v57, %v382
    %v384 = vand.u32 %v383, 4294901760
    %v385 = vsub.f32 %v383, %v384
    %v386 = vand.u32 %v385, 4294901760
    %387 = vmatpush1.msra.mxu0 %v386
    %v388 = vand.u32 %v60, 4294901760
    %v389 = vsub.f32 %v60, %v388
    %v390 = vand.u32 %v389, 4294901760
    %v391 = vsub.f32 %v389, %v390
    %v392 = vand.u32 %v391, 4294901760
    %393 = vmatprep.subr.mxu0 %v392
    %v394 = vand.u32 %v59, 4294901760
    %v395 = vsub.f32 %v59, %v394
    %v396 = vand.u32 %v395, 4294901760
    %v397 = vsub.f32 %v395, %v396
    %v398 = vand.u32 %v397, 4294901760
    %399 = vmatpush1.msra.mxu0 %v398
    %v400 = vand.u32 %v62, 4294901760
    %v401 = vsub.f32 %v62, %v400
    %v402 = vand.u32 %v401, 4294901760
    %v403 = vsub.f32 %v401, %v402
    %v404 = vand.u32 %v403, 4294901760
    %405 = vmatprep.subr.mxu0 %v404
    %v406 = vand.u32 %v61, 4294901760
    %v407 = vsub.f32 %v61, %v406
    %v408 = vand.u32 %v407, 4294901760
    %v409 = vsub.f32 %v407, %v408
    %v410 = vand.u32 %v409, 4294901760
    %411 = vmatpush1.msra.mxu0 %v410
    %v412 = vand.u32 %v64, 4294901760
    %v413 = vsub.f32 %v64, %v412
    %v414 = vand.u32 %v413, 4294901760
    %v415 = vsub.f32 %v413, %v414
    %v416 = vand.u32 %v415, 4294901760
    %417 = vmatprep.subr.mxu0 %v416
    %v418 = vand.u32 %v63, 4294901760
    %v419 = vsub.f32 %v63, %v418
    %v420 = vand.u32 %v419, 4294901760
    %v421 = vsub.f32 %v419, %v420
    %v422 = vand.u32 %v421, 4294901760
    %423 = vmatpush1.msra.mxu0 %v422
    %v424 = vand.u32 %v66, 4294901760
    %v425 = vsub.f32 %v66, %v424
    %v426 = vand.u32 %v425, 4294901760
    %v427 = vsub.f32 %v425, %v426
    %v428 = vand.u32 %v427, 4294901760
    %429 = vmatprep.subr.mxu0 %v428
    %v430 = vand.u32 %v65, 4294901760
    %v431 = vsub.f32 %v65, %v430
    %v432 = vand.u32 %v431, 4294901760
    %v433 = vsub.f32 %v431, %v432
    %v434 = vand.u32 %v433, 4294901760
    %435 = vmatpush1.msra.mxu0 %v434
    %v436 = vand.u32 %v68, 4294901760
    %v437 = vsub.f32 %v68, %v436
    %v438 = vand.u32 %v437, 4294901760
    %v439 = vsub.f32 %v437, %v438
    %v440 = vand.u32 %v439, 4294901760
    %441 = vmatprep.subr.mxu0 %v440
    %v442 = vand.u32 %v67, 4294901760
    %v443 = vsub.f32 %v67, %v442
    %v444 = vand.u32 %v443, 4294901760
    %v445 = vsub.f32 %v443, %v444
    %v446 = vand.u32 %v445, 4294901760
    %447 = vmatpush1.msra.mxu0 %v446
    %v448 = vand.u32 %v70, 4294901760
    %v449 = vsub.f32 %v70, %v448
    %v450 = vand.u32 %v449, 4294901760
    %v451 = vsub.f32 %v449, %v450
    %v452 = vand.u32 %v451, 4294901760
    %453 = vmatprep.subr.mxu0 %v452
    %v454 = vand.u32 %v69, 4294901760
    %v455 = vsub.f32 %v69, %v454
    %v456 = vand.u32 %v455, 4294901760
    %v457 = vsub.f32 %v455, %v456
    %v458 = vand.u32 %v457, 4294901760
    %459 = vmatpush1.msra.mxu0 %v458
    %v460 = vand.u32 %v72, 4294901760
    %v461 = vsub.f32 %v72, %v460
    %v462 = vand.u32 %v461, 4294901760
    %v463 = vsub.f32 %v461, %v462
    %v464 = vand.u32 %v463, 4294901760
    %465 = vmatprep.subr.mxu0 %v464
    %v466 = vand.u32 %v71, 4294901760
    %v467 = vsub.f32 %v71, %v466
    %v468 = vand.u32 %v467, 4294901760
    %v469 = vsub.f32 %v467, %v468
    %v470 = vand.u32 %v469, 4294901760
    %471 = vmatpush1.msra.mxu0 %v470
    %v472 = vand.u32 %v74, 4294901760
    %v473 = vsub.f32 %v74, %v472
    %v474 = vand.u32 %v473, 4294901760
    %v475 = vsub.f32 %v473, %v474
    %v476 = vand.u32 %v475, 4294901760
    %477 = vmatprep.subr.mxu0 %v476
    %v478 = vand.u32 %v73, 4294901760
    %v479 = vsub.f32 %v73, %v478
    %v480 = vand.u32 %v479, 4294901760
    %v481 = vsub.f32 %v479, %v480
    %v482 = vand.u32 %v481, 4294901760
    %483 = vmatpush1.msra.mxu0 %v482
    %v484 = vand.u32 %v76, 4294901760
    %v485 = vsub.f32 %v76, %v484
    %v486 = vand.u32 %v485, 4294901760
    %v487 = vsub.f32 %v485, %v486
    %v488 = vand.u32 %v487, 4294901760
    %489 = vmatprep.subr.mxu0 %v488
    %v490 = vand.u32 %v75, 4294901760
    %v491 = vsub.f32 %v75, %v490
    %v492 = vand.u32 %v491, 4294901760
    %v493 = vsub.f32 %v491, %v492
    %v494 = vand.u32 %v493, 4294901760
    %495 = vmatpush1.msra.mxu0 %v494
    %v496 = vand.u32 %v78, 4294901760
    %v497 = vsub.f32 %v78, %v496
    %v498 = vand.u32 %v497, 4294901760
    %v499 = vsub.f32 %v497, %v498
    %v500 = vand.u32 %v499, 4294901760
    %501 = vmatprep.subr.mxu0 %v500
    %v502 = vand.u32 %v77, 4294901760
    %v503 = vsub.f32 %v77, %v502
    %v504 = vand.u32 %v503, 4294901760
    %v505 = vsub.f32 %v503, %v504
    %v506 = vand.u32 %v505, 4294901760
    %507 = vmatpush1.msra.mxu0 %v506
    %v508 = vand.u32 %v80, 4294901760
    %v509 = vsub.f32 %v80, %v508
    %v510 = vand.u32 %v509, 4294901760
    %v511 = vsub.f32 %v509, %v510
    %v512 = vand.u32 %v511, 4294901760
    %513 = vmatprep.subr.mxu0 %v512
    %v514 = vand.u32 %v79, 4294901760
    %v515 = vsub.f32 %v79, %v514
    %v516 = vand.u32 %v515, 4294901760
    %v517 = vsub.f32 %v515, %v516
    %v518 = vand.u32 %v517, 4294901760
    %519 = vmatpush1.msra.mxu0 %v518
    %v520 = vand.u32 %v82, 4294901760
    %v521 = vsub.f32 %v82, %v520
    %v522 = vand.u32 %v521, 4294901760
    %v523 = vsub.f32 %v521, %v522
    %v524 = vand.u32 %v523, 4294901760
    %525 = vmatprep.subr.mxu0 %v524
    %v526 = vand.u32 %v81, 4294901760
    %v527 = vsub.f32 %v81, %v526
    %v528 = vand.u32 %v527, 4294901760
    %v529 = vsub.f32 %v527, %v528
    %v530 = vand.u32 %v529, 4294901760
    %531 = vmatpush1.msra.mxu0 %v530
    %v532 = vand.u32 %v84, 4294901760
    %v533 = vsub.f32 %v84, %v532
    %v534 = vand.u32 %v533, 4294901760
    %v535 = vsub.f32 %v533, %v534
    %v536 = vand.u32 %v535, 4294901760
    %537 = vmatprep.subr.mxu0 %v536
    %v538 = vand.u32 %v83, 4294901760
    %v539 = vsub.f32 %v83, %v538
    %v540 = vand.u32 %v539, 4294901760
    %v541 = vsub.f32 %v539, %v540
    %v542 = vand.u32 %v541, 4294901760
    %543 = vmatpush1.msra.mxu0 %v542
    %v544 = vand.u32 %v86, 4294901760
    %v545 = vsub.f32 %v86, %v544
    %v546 = vand.u32 %v545, 4294901760
    %v547 = vsub.f32 %v545, %v546
    %v548 = vand.u32 %v547, 4294901760
    %549 = vmatprep.subr.mxu0 %v548
    %v550 = vand.u32 %v85, 4294901760
    %v551 = vsub.f32 %v85, %v550
    %v552 = vand.u32 %v551, 4294901760
    %v553 = vsub.f32 %v551, %v552
    %v554 = vand.u32 %v553, 4294901760
    %555 = vmatpush1.msra.mxu0 %v554
    %v556 = vand.u32 %v88, 4294901760
    %v557 = vsub.f32 %v88, %v556
    %v558 = vand.u32 %v557, 4294901760
    %v559 = vsub.f32 %v557, %v558
    %v560 = vand.u32 %v559, 4294901760
    %561 = vmatprep.subr.mxu0 %v560
    %v562 = vand.u32 %v87, 4294901760
    %v563 = vsub.f32 %v87, %v562
    %v564 = vand.u32 %v563, 4294901760
    %v565 = vsub.f32 %v563, %v564
    %v566 = vand.u32 %v565, 4294901760
    %567 = vmatpush1.msra.mxu0 %v566
    %v568 = vand.u32 %v90, 4294901760
    %v569 = vsub.f32 %v90, %v568
    %v570 = vand.u32 %v569, 4294901760
    %v571 = vsub.f32 %v569, %v570
    %v572 = vand.u32 %v571, 4294901760
    %573 = vmatprep.subr.mxu0 %v572
    %v574 = vand.u32 %v89, 4294901760
    %v575 = vsub.f32 %v89, %v574
    %v576 = vand.u32 %v575, 4294901760
    %v577 = vsub.f32 %v575, %v576
    %v578 = vand.u32 %v577, 4294901760
    %579 = vmatpush1.msra.mxu0 %v578
    %v580 = vand.u32 %v92, 4294901760
    %v581 = vsub.f32 %v92, %v580
    %v582 = vand.u32 %v581, 4294901760
    %v583 = vsub.f32 %v581, %v582
    %v584 = vand.u32 %v583, 4294901760
    %585 = vmatprep.subr.mxu0 %v584
    %v586 = vand.u32 %v91, 4294901760
    %v587 = vsub.f32 %v91, %v586
    %v588 = vand.u32 %v587, 4294901760
    %v589 = vsub.f32 %v587, %v588
    %v590 = vand.u32 %v589, 4294901760
    %591 = vmatpush1.msra.mxu0 %v590
    %v592 = vand.u32 %v94, 4294901760
    %v593 = vsub.f32 %v94, %v592
    %v594 = vand.u32 %v593, 4294901760
    %v595 = vsub.f32 %v593, %v594
    %v596 = vand.u32 %v595, 4294901760
    %597 = vmatprep.subr.mxu0 %v596
    %v598 = vand.u32 %v93, 4294901760
    %v599 = vsub.f32 %v93, %v598
    %v600 = vand.u32 %v599, 4294901760
    %v601 = vsub.f32 %v599, %v600
    %v602 = vand.u32 %v601, 4294901760
    %603 = vmatpush1.msra.mxu0 %v602
    %v604 = vand.u32 %v96, 4294901760
    %v605 = vsub.f32 %v96, %v604
    %v606 = vand.u32 %v605, 4294901760
    %v607 = vsub.f32 %v605, %v606
    %v608 = vand.u32 %v607, 4294901760
    %609 = vmatprep.subr.mxu0 %v608
    %v610 = vand.u32 %v95, 4294901760
    %v611 = vsub.f32 %v95, %v610
    %v612 = vand.u32 %v611, 4294901760
    %v613 = vsub.f32 %v611, %v612
    %v614 = vand.u32 %v613, 4294901760
    %615 = vmatpush1.msra.mxu0 %v614
    %v616 = vand.u32 %v98, 4294901760
    %v617 = vsub.f32 %v98, %v616
    %v618 = vand.u32 %v617, 4294901760
    %v619 = vsub.f32 %v617, %v618
    %v620 = vand.u32 %v619, 4294901760
    %621 = vmatprep.subr.mxu0 %v620
    %v622 = vand.u32 %v97, 4294901760
    %v623 = vsub.f32 %v97, %v622
    %v624 = vand.u32 %v623, 4294901760
    %v625 = vsub.f32 %v623, %v624
    %v626 = vand.u32 %v625, 4294901760
    %627 = vmatpush1.msra.mxu0 %v626
    %v628 = vand.u32 %v100, 4294901760
    %v629 = vsub.f32 %v100, %v628
    %v630 = vand.u32 %v629, 4294901760
    %v631 = vsub.f32 %v629, %v630
    %v632 = vand.u32 %v631, 4294901760
    %633 = vmatprep.subr.mxu0 %v632
    %v634 = vand.u32 %v99, 4294901760
    %v635 = vsub.f32 %v99, %v634
    %v636 = vand.u32 %v635, 4294901760
    %v637 = vsub.f32 %v635, %v636
    %v638 = vand.u32 %v637, 4294901760
    %639 = vmatpush1.msra.mxu0 %v638
    %v640 = vand.u32 %v102, 4294901760
    %v641 = vsub.f32 %v102, %v640
    %v642 = vand.u32 %v641, 4294901760
    %v643 = vsub.f32 %v641, %v642
    %v644 = vand.u32 %v643, 4294901760
    %645 = vmatprep.subr.mxu0 %v644
    %v646 = vand.u32 %v101, 4294901760
    %v647 = vsub.f32 %v101, %v646
    %v648 = vand.u32 %v647, 4294901760
    %v649 = vsub.f32 %v647, %v648
    %v650 = vand.u32 %v649, 4294901760
    %651 = vmatpush1.msra.mxu0 %v650
    %v652 = vand.u32 %v104, 4294901760
    %v653 = vsub.f32 %v104, %v652
    %v654 = vand.u32 %v653, 4294901760
    %v655 = vsub.f32 %v653, %v654
    %v656 = vand.u32 %v655, 4294901760
    %657 = vmatprep.subr.mxu0 %v656
    %v658 = vand.u32 %v103, 4294901760
    %v659 = vsub.f32 %v103, %v658
    %v660 = vand.u32 %v659, 4294901760
    %v661 = vsub.f32 %v659, %v660
    %v662 = vand.u32 %v661, 4294901760
    %663 = vmatpush1.msra.mxu0 %v662
    %v664 = vand.u32 %v106, 4294901760
    %v665 = vsub.f32 %v106, %v664
    %v666 = vand.u32 %v665, 4294901760
    %v667 = vsub.f32 %v665, %v666
    %v668 = vand.u32 %v667, 4294901760
    %669 = vmatprep.subr.mxu0 %v668
    %v670 = vand.u32 %v105, 4294901760
    %v671 = vsub.f32 %v105, %v670
    %v672 = vand.u32 %v671, 4294901760
    %v673 = vsub.f32 %v671, %v672
    %v674 = vand.u32 %v673, 4294901760
    %675 = vmatpush1.msra.mxu0 %v674
    %v676 = vand.u32 %v108, 4294901760
    %v677 = vsub.f32 %v108, %v676
    %v678 = vand.u32 %v677, 4294901760
    %v679 = vsub.f32 %v677, %v678
    %v680 = vand.u32 %v679, 4294901760
    %681 = vmatprep.subr.mxu0 %v680
    %v682 = vand.u32 %v107, 4294901760
    %v683 = vsub.f32 %v107, %v682
    %v684 = vand.u32 %v683, 4294901760
    %v685 = vsub.f32 %v683, %v684
    %v686 = vand.u32 %v685, 4294901760
    %687 = vmatpush1.msra.mxu0 %v686
    %v688 = vand.u32 %v110, 4294901760
    %v689 = vsub.f32 %v110, %v688
    %v690 = vand.u32 %v689, 4294901760
    %v691 = vsub.f32 %v689, %v690
    %v692 = vand.u32 %v691, 4294901760
    %693 = vmatprep.subr.mxu0 %v692
    %v694 = vand.u32 %v109, 4294901760
    %v695 = vsub.f32 %v109, %v694
    %v696 = vand.u32 %v695, 4294901760
    %v697 = vsub.f32 %v695, %v696
    %v698 = vand.u32 %v697, 4294901760
    %699 = vmatpush1.msra.mxu0 %v698
    %v700 = vand.u32 %v112, 4294901760
    %v701 = vsub.f32 %v112, %v700
    %v702 = vand.u32 %v701, 4294901760
    %v703 = vsub.f32 %v701, %v702
    %v704 = vand.u32 %v703, 4294901760
    %705 = vmatprep.subr.mxu0 %v704
    %v706 = vand.u32 %v111, 4294901760
    %v707 = vsub.f32 %v111, %v706
    %v708 = vand.u32 %v707, 4294901760
    %v709 = vsub.f32 %v707, %v708
    %v710 = vand.u32 %v709, 4294901760
    %711 = vmatpush1.msra.mxu0 %v710
    %v712 = vand.u32 %v114, 4294901760
    %v713 = vsub.f32 %v114, %v712
    %v714 = vand.u32 %v713, 4294901760
    %v715 = vsub.f32 %v713, %v714
    %v716 = vand.u32 %v715, 4294901760
    %717 = vmatprep.subr.mxu0 %v716
    %v718 = vand.u32 %v113, 4294901760
    %v719 = vsub.f32 %v113, %v718
    %v720 = vand.u32 %v719, 4294901760
    %v721 = vsub.f32 %v719, %v720
    %v722 = vand.u32 %v721, 4294901760
    %723 = vmatpush1.msra.mxu0 %v722
    %v724 = vand.u32 %v44, 4294901760
    %725 = vmatprep.mubr.f32.mxu0 %v724
    %v726 = vand.u32 %v43, 4294901760
    %727 = vmatmul.mubr.f32.gmra.mrb[0].mxu0 %v726
    %v728 = vpop.f32.mrb[0].mxu0
    %v729 = vadd.f32 %v320, %v728
    %v730 = vpop.f32.mrb[0].mxu0
    %v731 = vadd.f32 %v322, %v730
    %v732 = vand.u32 %v48, 4294901760
    %733 = vmatprep.mubr.f32.mxu0 %v732
    %v734 = vand.u32 %v47, 4294901760
    %735 = vmatmul.mubr.f32.gmra.mrb[0].mxu0 %v734
    %v736 = vpop.f32.mrb[0].mxu0
    %v737 = vadd.f32 %v336, %v736
    %v738 = vpop.f32.mrb[0].mxu0
    %v739 = vadd.f32 %v338, %v738
    %740 = vdwg.mxu0
    %v741 = vand.u32 %v52, 4294901760
    %v742 = vsub.f32 %v52, %v741
    %743 = vmatprep.subr.mxu0 %v742
    %v744 = vand.u32 %v51, 4294901760
    %v745 = vsub.f32 %v51, %v744
    %746 = vmatpush1.msra.mxu0 %v745
    %v747 = vand.u32 %v54, 4294901760
    %v748 = vsub.f32 %v54, %v747
    %749 = vmatprep.subr.mxu0 %v748
    %v750 = vand.u32 %v53, 4294901760
    %v751 = vsub.f32 %v53, %v750
    %752 = vmatpush1.msra.mxu0 %v751
    %v753 = vand.u32 %v56, 4294901760
    %v754 = vsub.f32 %v56, %v753
    %755 = vmatprep.subr.mxu0 %v754
    %v756 = vand.u32 %v55, 4294901760
    %v757 = vsub.f32 %v55, %v756
    %758 = vmatpush1.msra.mxu0 %v757
    %v759 = vand.u32 %v58, 4294901760
    %v760 = vsub.f32 %v58, %v759
    %761 = vmatprep.subr.mxu0 %v760
    %v762 = vand.u32 %v57, 4294901760
    %v763 = vsub.f32 %v57, %v762
    %764 = vmatpush1.msra.mxu0 %v763
    %v765 = vand.u32 %v60, 4294901760
    %v766 = vsub.f32 %v60, %v765
    %767 = vmatprep.subr.mxu0 %v766
    %v768 = vand.u32 %v59, 4294901760
    %v769 = vsub.f32 %v59, %v768
    %770 = vmatpush1.msra.mxu0 %v769
    %v771 = vand.u32 %v62, 4294901760
    %v772 = vsub.f32 %v62, %v771
    %773 = vmatprep.subr.mxu0 %v772
    %v774 = vand.u32 %v61, 4294901760
    %v775 = vsub.f32 %v61, %v774
    %776 = vmatpush1.msra.mxu0 %v775
    %v777 = vand.u32 %v64, 4294901760
    %v778 = vsub.f32 %v64, %v777
    %779 = vmatprep.subr.mxu0 %v778
    %v780 = vand.u32 %v63, 4294901760
    %v781 = vsub.f32 %v63, %v780
    %782 = vmatpush1.msra.mxu0 %v781
    %v783 = vand.u32 %v66, 4294901760
    %v784 = vsub.f32 %v66, %v783
    %785 = vmatprep.subr.mxu0 %v784
    %v786 = vand.u32 %v65, 4294901760
    %v787 = vsub.f32 %v65, %v786
    %788 = vmatpush1.msra.mxu0 %v787
    %v789 = vand.u32 %v68, 4294901760
    %v790 = vsub.f32 %v68, %v789
    %791 = vmatprep.subr.mxu0 %v790
    %v792 = vand.u32 %v67, 4294901760
    %v793 = vsub.f32 %v67, %v792
    %794 = vmatpush1.msra.mxu0 %v793
    %v795 = vand.u32 %v70, 4294901760
    %v796 = vsub.f32 %v70, %v795
    %797 = vmatprep.subr.mxu0 %v796
    %v798 = vand.u32 %v69, 4294901760
    %v799 = vsub.f32 %v69, %v798
    %800 = vmatpush1.msra.mxu0 %v799
    %v801 = vand.u32 %v72, 4294901760
    %v802 = vsub.f32 %v72, %v801
    %803 = vmatprep.subr.mxu0 %v802
    %v804 = vand.u32 %v71, 4294901760
    %v805 = vsub.f32 %v71, %v804
    %806 = vmatpush1.msra.mxu0 %v805
    %v807 = vand.u32 %v74, 4294901760
    %v808 = vsub.f32 %v74, %v807
    %809 = vmatprep.subr.mxu0 %v808
    %v810 = vand.u32 %v73, 4294901760
    %v811 = vsub.f32 %v73, %v810
    %812 = vmatpush1.msra.mxu0 %v811
    %v813 = vand.u32 %v76, 4294901760
    %v814 = vsub.f32 %v76, %v813
    %815 = vmatprep.subr.mxu0 %v814
    %v816 = vand.u32 %v75, 4294901760
    %v817 = vsub.f32 %v75, %v816
    %818 = vmatpush1.msra.mxu0 %v817
    %v819 = vand.u32 %v78, 4294901760
    %v820 = vsub.f32 %v78, %v819
    %821 = vmatprep.subr.mxu0 %v820
    %v822 = vand.u32 %v77, 4294901760
    %v823 = vsub.f32 %v77, %v822
    %824 = vmatpush1.msra.mxu0 %v823
    %v825 = vand.u32 %v80, 4294901760
    %v826 = vsub.f32 %v80, %v825
    %827 = vmatprep.subr.mxu0 %v826
    %v828 = vand.u32 %v79, 4294901760
    %v829 = vsub.f32 %v79, %v828
    %830 = vmatpush1.msra.mxu0 %v829
    %v831 = vand.u32 %v82, 4294901760
    %v832 = vsub.f32 %v82, %v831
    %833 = vmatprep.subr.mxu0 %v832
    %v834 = vand.u32 %v81, 4294901760
    %v835 = vsub.f32 %v81, %v834
    %836 = vmatpush1.msra.mxu0 %v835
    %v837 = vand.u32 %v84, 4294901760
    %v838 = vsub.f32 %v84, %v837
    %839 = vmatprep.subr.mxu0 %v838
    %v840 = vand.u32 %v83, 4294901760
    %v841 = vsub.f32 %v83, %v840
    %842 = vmatpush1.msra.mxu0 %v841
    %v843 = vand.u32 %v86, 4294901760
    %v844 = vsub.f32 %v86, %v843
    %845 = vmatprep.subr.mxu0 %v844
    %v846 = vand.u32 %v85, 4294901760
    %v847 = vsub.f32 %v85, %v846
    %848 = vmatpush1.msra.mxu0 %v847
    %v849 = vand.u32 %v88, 4294901760
    %v850 = vsub.f32 %v88, %v849
    %851 = vmatprep.subr.mxu0 %v850
    %v852 = vand.u32 %v87, 4294901760
    %v853 = vsub.f32 %v87, %v852
    %854 = vmatpush1.msra.mxu0 %v853
    %v855 = vand.u32 %v90, 4294901760
    %v856 = vsub.f32 %v90, %v855
    %857 = vmatprep.subr.mxu0 %v856
    %v858 = vand.u32 %v89, 4294901760
    %v859 = vsub.f32 %v89, %v858
    %860 = vmatpush1.msra.mxu0 %v859
    %v861 = vand.u32 %v92, 4294901760
    %v862 = vsub.f32 %v92, %v861
    %863 = vmatprep.subr.mxu0 %v862
    %v864 = vand.u32 %v91, 4294901760
    %v865 = vsub.f32 %v91, %v864
    %866 = vmatpush1.msra.mxu0 %v865
    %v867 = vand.u32 %v94, 4294901760
    %v868 = vsub.f32 %v94, %v867
    %869 = vmatprep.subr.mxu0 %v868
    %v870 = vand.u32 %v93, 4294901760
    %v871 = vsub.f32 %v93, %v870
    %872 = vmatpush1.msra.mxu0 %v871
    %v873 = vand.u32 %v96, 4294901760
    %v874 = vsub.f32 %v96, %v873
    %875 = vmatprep.subr.mxu0 %v874
    %v876 = vand.u32 %v95, 4294901760
    %v877 = vsub.f32 %v95, %v876
    %878 = vmatpush1.msra.mxu0 %v877
    %v879 = vand.u32 %v98, 4294901760
    %v880 = vsub.f32 %v98, %v879
    %881 = vmatprep.subr.mxu0 %v880
    %v882 = vand.u32 %v97, 4294901760
    %v883 = vsub.f32 %v97, %v882
    %884 = vmatpush1.msra.mxu0 %v883
    %v885 = vand.u32 %v100, 4294901760
    %v886 = vsub.f32 %v100, %v885
    %887 = vmatprep.subr.mxu0 %v886
    %v888 = vand.u32 %v99, 4294901760
    %v889 = vsub.f32 %v99, %v888
    %890 = vmatpush1.msra.mxu0 %v889
    %v891 = vand.u32 %v102, 4294901760
    %v892 = vsub.f32 %v102, %v891
    %893 = vmatprep.subr.mxu0 %v892
    %v894 = vand.u32 %v101, 4294901760
    %v895 = vsub.f32 %v101, %v894
    %896 = vmatpush1.msra.mxu0 %v895
    %v897 = vand.u32 %v104, 4294901760
    %v898 = vsub.f32 %v104, %v897
    %899 = vmatprep.subr.mxu0 %v898
    %v900 = vand.u32 %v103, 4294901760
    %v901 = vsub.f32 %v103, %v900
    %902 = vmatpush1.msra.mxu0 %v901
    %v903 = vand.u32 %v106, 4294901760
    %v904 = vsub.f32 %v106, %v903
    %905 = vmatprep.subr.mxu0 %v904
    %v906 = vand.u32 %v105, 4294901760
    %v907 = vsub.f32 %v105, %v906
    %908 = vmatpush1.msra.mxu0 %v907
    %v909 = vand.u32 %v108, 4294901760
    %v910 = vsub.f32 %v108, %v909
    %911 = vmatprep.subr.mxu0 %v910
    %v912 = vand.u32 %v107, 4294901760
    %v913 = vsub.f32 %v107, %v912
    %914 = vmatpush1.msra.mxu0 %v913
    %v915 = vand.u32 %v110, 4294901760
    %v916 = vsub.f32 %v110, %v915
    %917 = vmatprep.subr.mxu0 %v916
    %v918 = vand.u32 %v109, 4294901760
    %v919 = vsub.f32 %v109, %v918
    %920 = vmatpush1.msra.mxu0 %v919
    %v921 = vand.u32 %v112, 4294901760
    %v922 = vsub.f32 %v112, %v921
    %923 = vmatprep.subr.mxu0 %v922
    %v924 = vand.u32 %v111, 4294901760
    %v925 = vsub.f32 %v111, %v924
    %926 = vmatpush1.msra.mxu0 %v925
    %v927 = vand.u32 %v114, 4294901760
    %v928 = vsub.f32 %v114, %v927
    %929 = vmatprep.subr.mxu0 %v928
    %v930 = vand.u32 %v113, 4294901760
    %v931 = vsub.f32 %v113, %v930
    %932 = vmatpush1.msra.mxu0 %v931
    %v933 = vand.u32 %v44, 4294901760
    %v934 = vsub.f32 %v44, %v933
    %935 = vmatprep.mubr.f32.mxu0 %v934
    %v936 = vand.u32 %v43, 4294901760
    %v937 = vsub.f32 %v43, %v936
    %938 = vmatmul.mubr.f32.gmra.mrb[0].mxu0 %v937
    %v939 = vpop.f32.mrb[0].mxu0
    %v940 = vadd.f32 %v729, %v939
    %v941 = vpop.f32.mrb[0].mxu0
    %v942 = vadd.f32 %v731, %v941
    %v943 = vand.u32 %v48, 4294901760
    %v944 = vsub.f32 %v48, %v943
    %945 = vmatprep.mubr.f32.mxu0 %v944
    %v946 = vand.u32 %v47, 4294901760
    %v947 = vsub.f32 %v47, %v946
    %948 = vmatmul.mubr.f32.gmra.mrb[0].mxu0 %v947
    %v949 = vpop.f32.mrb[0].mxu0
    %v950 = vadd.f32 %v737, %v949
    %v951 = vpop.f32.mrb[0].mxu0
    %v952 = vadd.f32 %v739, %v951
    %953 = vdwg.mxu0
    %v954 = vand.u32 %v52, 4294901760
    %955 = vmatprep.subr.mxu0 %v954
    %v956 = vand.u32 %v51, 4294901760
    %957 = vmatpush1.msra.mxu0 %v956
    %v958 = vand.u32 %v54, 4294901760
    %959 = vmatprep.subr.mxu0 %v958
    %v960 = vand.u32 %v53, 4294901760
    %961 = vmatpush1.msra.mxu0 %v960
    %v962 = vand.u32 %v56, 4294901760
    %963 = vmatprep.subr.mxu0 %v962
    %v964 = vand.u32 %v55, 4294901760
    %965 = vmatpush1.msra.mxu0 %v964
    %v966 = vand.u32 %v58, 4294901760
    %967 = vmatprep.subr.mxu0 %v966
    %v968 = vand.u32 %v57, 4294901760
    %969 = vmatpush1.msra.mxu0 %v968
    %v970 = vand.u32 %v60, 4294901760
    %971 = vmatprep.subr.mxu0 %v970
    %v972 = vand.u32 %v59, 4294901760
    %973 = vmatpush1.msra.mxu0 %v972
    %v974 = vand.u32 %v62, 4294901760
    %975 = vmatprep.subr.mxu0 %v974
    %v976 = vand.u32 %v61, 4294901760
    %977 = vmatpush1.msra.mxu0 %v976
    %v978 = vand.u32 %v64, 4294901760
    %979 = vmatprep.subr.mxu0 %v978
    %v980 = vand.u32 %v63, 4294901760
    %981 = vmatpush1.msra.mxu0 %v980
    %v982 = vand.u32 %v66, 4294901760
    %983 = vmatprep.subr.mxu0 %v982
    %v984 = vand.u32 %v65, 4294901760
    %985 = vmatpush1.msra.mxu0 %v984
    %v986 = vand.u32 %v68, 4294901760
    %987 = vmatprep.subr.mxu0 %v986
    %v988 = vand.u32 %v67, 4294901760
    %989 = vmatpush1.msra.mxu0 %v988
    %v990 = vand.u32 %v70, 4294901760
    %991 = vmatprep.subr.mxu0 %v990
    %v992 = vand.u32 %v69, 4294901760
    %993 = vmatpush1.msra.mxu0 %v992
    %v994 = vand.u32 %v72, 4294901760
    %995 = vmatprep.subr.mxu0 %v994
    %v996 = vand.u32 %v71, 4294901760
    %997 = vmatpush1.msra.mxu0 %v996
    %v998 = vand.u32 %v74, 4294901760
    %999 = vmatprep.subr.mxu0 %v998
    %v1000 = vand.u32 %v73, 4294901760
    %1001 = vmatpush1.msra.mxu0 %v1000
    %v1002 = vand.u32 %v76, 4294901760
    %1003 = vmatprep.subr.mxu0 %v1002
    %v1004 = vand.u32 %v75, 4294901760
    %1005 = vmatpush1.msra.mxu0 %v1004
    %v1006 = vand.u32 %v78, 4294901760
    %1007 = vmatprep.subr.mxu0 %v1006
    %v1008 = vand.u32 %v77, 4294901760
    %1009 = vmatpush1.msra.mxu0 %v1008
    %v1010 = vand.u32 %v80, 4294901760
    %1011 = vmatprep.subr.mxu0 %v1010
    %v1012 = vand.u32 %v79, 4294901760
    %1013 = vmatpush1.msra.mxu0 %v1012
    %v1014 = vand.u32 %v82, 4294901760
    %1015 = vmatprep.subr.mxu0 %v1014
    %v1016 = vand.u32 %v81, 4294901760
    %1017 = vmatpush1.msra.mxu0 %v1016
    %v1018 = vand.u32 %v84, 4294901760
    %1019 = vmatprep.subr.mxu0 %v1018
    %v1020 = vand.u32 %v83, 4294901760
    %1021 = vmatpush1.msra.mxu0 %v1020
    %v1022 = vand.u32 %v86, 4294901760
    %1023 = vmatprep.subr.mxu0 %v1022
    %v1024 = vand.u32 %v85, 4294901760
    %1025 = vmatpush1.msra.mxu0 %v1024
    %v1026 = vand.u32 %v88, 4294901760
    %1027 = vmatprep.subr.mxu0 %v1026
    %v1028 = vand.u32 %v87, 4294901760
    %1029 = vmatpush1.msra.mxu0 %v1028
    %v1030 = vand.u32 %v90, 4294901760
    %1031 = vmatprep.subr.mxu0 %v1030
    %v1032 = vand.u32 %v89, 4294901760
    %1033 = vmatpush1.msra.mxu0 %v1032
    %v1034 = vand.u32 %v92, 4294901760
    %1035 = vmatprep.subr.mxu0 %v1034
    %v1036 = vand.u32 %v91, 4294901760
    %1037 = vmatpush1.msra.mxu0 %v1036
    %v1038 = vand.u32 %v94, 4294901760
    %1039 = vmatprep.subr.mxu0 %v1038
    %v1040 = vand.u32 %v93, 4294901760
    %1041 = vmatpush1.msra.mxu0 %v1040
    %v1042 = vand.u32 %v96, 4294901760
    %1043 = vmatprep.subr.mxu0 %v1042
    %v1044 = vand.u32 %v95, 4294901760
    %1045 = vmatpush1.msra.mxu0 %v1044
    %v1046 = vand.u32 %v98, 4294901760
    %1047 = vmatprep.subr.mxu0 %v1046
    %v1048 = vand.u32 %v97, 4294901760
    %1049 = vmatpush1.msra.mxu0 %v1048
    %v1050 = vand.u32 %v100, 4294901760
    %1051 = vmatprep.subr.mxu0 %v1050
    %v1052 = vand.u32 %v99, 4294901760
    %1053 = vmatpush1.msra.mxu0 %v1052
    %v1054 = vand.u32 %v102, 4294901760
    %1055 = vmatprep.subr.mxu0 %v1054
    %v1056 = vand.u32 %v101, 4294901760
    %1057 = vmatpush1.msra.mxu0 %v1056
    %v1058 = vand.u32 %v104, 4294901760
    %1059 = vmatprep.subr.mxu0 %v1058
    %v1060 = vand.u32 %v103, 4294901760
    %1061 = vmatpush1.msra.mxu0 %v1060
    %v1062 = vand.u32 %v106, 4294901760
    %1063 = vmatprep.subr.mxu0 %v1062
    %v1064 = vand.u32 %v105, 4294901760
    %1065 = vmatpush1.msra.mxu0 %v1064
    %v1066 = vand.u32 %v108, 4294901760
    %1067 = vmatprep.subr.mxu0 %v1066
    %v1068 = vand.u32 %v107, 4294901760
    %1069 = vmatpush1.msra.mxu0 %v1068
    %v1070 = vand.u32 %v110, 4294901760
    %1071 = vmatprep.subr.mxu0 %v1070
    %v1072 = vand.u32 %v109, 4294901760
    %1073 = vmatpush1.msra.mxu0 %v1072
    %v1074 = vand.u32 %v112, 4294901760
    %1075 = vmatprep.subr.mxu0 %v1074
    %v1076 = vand.u32 %v111, 4294901760
    %1077 = vmatpush1.msra.mxu0 %v1076
    %v1078 = vand.u32 %v114, 4294901760
    %1079 = vmatprep.subr.mxu0 %v1078
    %v1080 = vand.u32 %v113, 4294901760
    %1081 = vmatpush1.msra.mxu0 %v1080
    %v1082 = vand.u32 %v44, 4294901760
    %v1083 = vsub.f32 %v44, %v1082
    %v1084 = vand.u32 %v1083, 4294901760
    %1085 = vmatprep.mubr.f32.mxu0 %v1084
    %v1086 = vand.u32 %v43, 4294901760
    %v1087 = vsub.f32 %v43, %v1086
    %v1088 = vand.u32 %v1087, 4294901760
    %1089 = vmatmul.mubr.f32.gmra.mrb[0].mxu0 %v1088
    %v1090 = vpop.f32.mrb[0].mxu0
    %v1091 = vadd.f32 %v940, %v1090
    %v1092 = vpop.f32.mrb[0].mxu0
    %v1093 = vadd.f32 %v942, %v1092
    %v1094 = vand.u32 %v48, 4294901760
    %v1095 = vsub.f32 %v48, %v1094
    %v1096 = vand.u32 %v1095, 4294901760
    %1097 = vmatprep.mubr.f32.mxu0 %v1096
    %v1098 = vand.u32 %v47, 4294901760
    %v1099 = vsub.f32 %v47, %v1098
    %v1100 = vand.u32 %v1099, 4294901760
    %1101 = vmatmul.mubr.f32.gmra.mrb[0].mxu0 %v1100
    %v1102 = vpop.f32.mrb[0].mxu0
    %v1103 = vadd.f32 %v950, %v1102
    %v1104 = vpop.f32.mrb[0].mxu0
    %v1105 = vadd.f32 %v952, %v1104
    %1106 = vdwg.mxu0
    %v1107 = vand.u32 %v52, 4294901760
    %v1108 = vsub.f32 %v52, %v1107
    %v1109 = vand.u32 %v1108, 4294901760
    %1110 = vmatprep.subr.mxu0 %v1109
    %v1111 = vand.u32 %v51, 4294901760
    %v1112 = vsub.f32 %v51, %v1111
    %v1113 = vand.u32 %v1112, 4294901760
    %1114 = vmatpush1.msra.mxu0 %v1113
    %v1115 = vand.u32 %v54, 4294901760
    %v1116 = vsub.f32 %v54, %v1115
    %v1117 = vand.u32 %v1116, 4294901760
    %1118 = vmatprep.subr.mxu0 %v1117
    %v1119 = vand.u32 %v53, 4294901760
    %v1120 = vsub.f32 %v53, %v1119
    %v1121 = vand.u32 %v1120, 4294901760
    %1122 = vmatpush1.msra.mxu0 %v1121
    %v1123 = vand.u32 %v56, 4294901760
    %v1124 = vsub.f32 %v56, %v1123
    %v1125 = vand.u32 %v1124, 4294901760
    %1126 = vmatprep.subr.mxu0 %v1125
    %v1127 = vand.u32 %v55, 4294901760
    %v1128 = vsub.f32 %v55, %v1127
    %v1129 = vand.u32 %v1128, 4294901760
    %1130 = vmatpush1.msra.mxu0 %v1129
    %v1131 = vand.u32 %v58, 4294901760
    %v1132 = vsub.f32 %v58, %v1131
    %v1133 = vand.u32 %v1132, 4294901760
    %1134 = vmatprep.subr.mxu0 %v1133
    %v1135 = vand.u32 %v57, 4294901760
    %v1136 = vsub.f32 %v57, %v1135
    %v1137 = vand.u32 %v1136, 4294901760
    %1138 = vmatpush1.msra.mxu0 %v1137
    %v1139 = vand.u32 %v60, 4294901760
    %v1140 = vsub.f32 %v60, %v1139
    %v1141 = vand.u32 %v1140, 4294901760
    %1142 = vmatprep.subr.mxu0 %v1141
    %v1143 = vand.u32 %v59, 4294901760
    %v1144 = vsub.f32 %v59, %v1143
    %v1145 = vand.u32 %v1144, 4294901760
    %1146 = vmatpush1.msra.mxu0 %v1145
    %v1147 = vand.u32 %v62, 4294901760
    %v1148 = vsub.f32 %v62, %v1147
    %v1149 = vand.u32 %v1148, 4294901760
    %1150 = vmatprep.subr.mxu0 %v1149
    %v1151 = vand.u32 %v61, 4294901760
    %v1152 = vsub.f32 %v61, %v1151
    %v1153 = vand.u32 %v1152, 4294901760
    %1154 = vmatpush1.msra.mxu0 %v1153
    %v1155 = vand.u32 %v64, 4294901760
    %v1156 = vsub.f32 %v64, %v1155
    %v1157 = vand.u32 %v1156, 4294901760
    %1158 = vmatprep.subr.mxu0 %v1157
    %v1159 = vand.u32 %v63, 4294901760
    %v1160 = vsub.f32 %v63, %v1159
    %v1161 = vand.u32 %v1160, 4294901760
    %1162 = vmatpush1.msra.mxu0 %v1161
    %v1163 = vand.u32 %v66, 4294901760
    %v1164 = vsub.f32 %v66, %v1163
    %v1165 = vand.u32 %v1164, 4294901760
    %1166 = vmatprep.subr.mxu0 %v1165
    %v1167 = vand.u32 %v65, 4294901760
    %v1168 = vsub.f32 %v65, %v1167
    %v1169 = vand.u32 %v1168, 4294901760
    %1170 = vmatpush1.msra.mxu0 %v1169
    %v1171 = vand.u32 %v68, 4294901760
    %v1172 = vsub.f32 %v68, %v1171
    %v1173 = vand.u32 %v1172, 4294901760
    %1174 = vmatprep.subr.mxu0 %v1173
    %v1175 = vand.u32 %v67, 4294901760
    %v1176 = vsub.f32 %v67, %v1175
    %v1177 = vand.u32 %v1176, 4294901760
    %1178 = vmatpush1.msra.mxu0 %v1177
    %v1179 = vand.u32 %v70, 4294901760
    %v1180 = vsub.f32 %v70, %v1179
    %v1181 = vand.u32 %v1180, 4294901760
    %1182 = vmatprep.subr.mxu0 %v1181
    %v1183 = vand.u32 %v69, 4294901760
    %v1184 = vsub.f32 %v69, %v1183
    %v1185 = vand.u32 %v1184, 4294901760
    %1186 = vmatpush1.msra.mxu0 %v1185
    %v1187 = vand.u32 %v72, 4294901760
    %v1188 = vsub.f32 %v72, %v1187
    %v1189 = vand.u32 %v1188, 4294901760
    %1190 = vmatprep.subr.mxu0 %v1189
    %v1191 = vand.u32 %v71, 4294901760
    %v1192 = vsub.f32 %v71, %v1191
    %v1193 = vand.u32 %v1192, 4294901760
    %1194 = vmatpush1.msra.mxu0 %v1193
    %v1195 = vand.u32 %v74, 4294901760
    %v1196 = vsub.f32 %v74, %v1195
    %v1197 = vand.u32 %v1196, 4294901760
    %1198 = vmatprep.subr.mxu0 %v1197
    %v1199 = vand.u32 %v73, 4294901760
    %v1200 = vsub.f32 %v73, %v1199
    %v1201 = vand.u32 %v1200, 4294901760
    %1202 = vmatpush1.msra.mxu0 %v1201
    %v1203 = vand.u32 %v76, 4294901760
    %v1204 = vsub.f32 %v76, %v1203
    %v1205 = vand.u32 %v1204, 4294901760
    %1206 = vmatprep.subr.mxu0 %v1205
    %v1207 = vand.u32 %v75, 4294901760
    %v1208 = vsub.f32 %v75, %v1207
    %v1209 = vand.u32 %v1208, 4294901760
    %1210 = vmatpush1.msra.mxu0 %v1209
    %v1211 = vand.u32 %v78, 4294901760
    %v1212 = vsub.f32 %v78, %v1211
    %v1213 = vand.u32 %v1212, 4294901760
    %1214 = vmatprep.subr.mxu0 %v1213
    %v1215 = vand.u32 %v77, 4294901760
    %v1216 = vsub.f32 %v77, %v1215
    %v1217 = vand.u32 %v1216, 4294901760
    %1218 = vmatpush1.msra.mxu0 %v1217
    %v1219 = vand.u32 %v80, 4294901760
    %v1220 = vsub.f32 %v80, %v1219
    %v1221 = vand.u32 %v1220, 4294901760
    %1222 = vmatprep.subr.mxu0 %v1221
    %v1223 = vand.u32 %v79, 4294901760
    %v1224 = vsub.f32 %v79, %v1223
    %v1225 = vand.u32 %v1224, 4294901760
    %1226 = vmatpush1.msra.mxu0 %v1225
    %v1227 = vand.u32 %v82, 4294901760
    %v1228 = vsub.f32 %v82, %v1227
    %v1229 = vand.u32 %v1228, 4294901760
    %1230 = vmatprep.subr.mxu0 %v1229
    %v1231 = vand.u32 %v81, 4294901760
    %v1232 = vsub.f32 %v81, %v1231
    %v1233 = vand.u32 %v1232, 4294901760
    %1234 = vmatpush1.msra.mxu0 %v1233
    %v1235 = vand.u32 %v84, 4294901760
    %v1236 = vsub.f32 %v84, %v1235
    %v1237 = vand.u32 %v1236, 4294901760
    %1238 = vmatprep.subr.mxu0 %v1237
    %v1239 = vand.u32 %v83, 4294901760
    %v1240 = vsub.f32 %v83, %v1239
    %v1241 = vand.u32 %v1240, 4294901760
    %1242 = vmatpush1.msra.mxu0 %v1241
    %v1243 = vand.u32 %v86, 4294901760
    %v1244 = vsub.f32 %v86, %v1243
    %v1245 = vand.u32 %v1244, 4294901760
    %1246 = vmatprep.subr.mxu0 %v1245
    %v1247 = vand.u32 %v85, 4294901760
    %v1248 = vsub.f32 %v85, %v1247
    %v1249 = vand.u32 %v1248, 4294901760
    %1250 = vmatpush1.msra.mxu0 %v1249
    %v1251 = vand.u32 %v88, 4294901760
    %v1252 = vsub.f32 %v88, %v1251
    %v1253 = vand.u32 %v1252, 4294901760
    %1254 = vmatprep.subr.mxu0 %v1253
    %v1255 = vand.u32 %v87, 4294901760
    %v1256 = vsub.f32 %v87, %v1255
    %v1257 = vand.u32 %v1256, 4294901760
    %1258 = vmatpush1.msra.mxu0 %v1257
    %v1259 = vand.u32 %v90, 4294901760
    %v1260 = vsub.f32 %v90, %v1259
    %v1261 = vand.u32 %v1260, 4294901760
    %1262 = vmatprep.subr.mxu0 %v1261
    %v1263 = vand.u32 %v89, 4294901760
    %v1264 = vsub.f32 %v89, %v1263
    %v1265 = vand.u32 %v1264, 4294901760
    %1266 = vmatpush1.msra.mxu0 %v1265
    %v1267 = vand.u32 %v92, 4294901760
    %v1268 = vsub.f32 %v92, %v1267
    %v1269 = vand.u32 %v1268, 4294901760
    %1270 = vmatprep.subr.mxu0 %v1269
    %v1271 = vand.u32 %v91, 4294901760
    %v1272 = vsub.f32 %v91, %v1271
    %v1273 = vand.u32 %v1272, 4294901760
    %1274 = vmatpush1.msra.mxu0 %v1273
    %v1275 = vand.u32 %v94, 4294901760
    %v1276 = vsub.f32 %v94, %v1275
    %v1277 = vand.u32 %v1276, 4294901760
    %1278 = vmatprep.subr.mxu0 %v1277
    %v1279 = vand.u32 %v93, 4294901760
    %v1280 = vsub.f32 %v93, %v1279
    %v1281 = vand.u32 %v1280, 4294901760
    %1282 = vmatpush1.msra.mxu0 %v1281
    %v1283 = vand.u32 %v96, 4294901760
    %v1284 = vsub.f32 %v96, %v1283
    %v1285 = vand.u32 %v1284, 4294901760
    %1286 = vmatprep.subr.mxu0 %v1285
    %v1287 = vand.u32 %v95, 4294901760
    %v1288 = vsub.f32 %v95, %v1287
    %v1289 = vand.u32 %v1288, 4294901760
    %1290 = vmatpush1.msra.mxu0 %v1289
    %v1291 = vand.u32 %v98, 4294901760
    %v1292 = vsub.f32 %v98, %v1291
    %v1293 = vand.u32 %v1292, 4294901760
    %1294 = vmatprep.subr.mxu0 %v1293
    %v1295 = vand.u32 %v97, 4294901760
    %v1296 = vsub.f32 %v97, %v1295
    %v1297 = vand.u32 %v1296, 4294901760
    %1298 = vmatpush1.msra.mxu0 %v1297
    %v1299 = vand.u32 %v100, 4294901760
    %v1300 = vsub.f32 %v100, %v1299
    %v1301 = vand.u32 %v1300, 4294901760
    %1302 = vmatprep.subr.mxu0 %v1301
    %v1303 = vand.u32 %v99, 4294901760
    %v1304 = vsub.f32 %v99, %v1303
    %v1305 = vand.u32 %v1304, 4294901760
    %1306 = vmatpush1.msra.mxu0 %v1305
    %v1307 = vand.u32 %v102, 4294901760
    %v1308 = vsub.f32 %v102, %v1307
    %v1309 = vand.u32 %v1308, 4294901760
    %1310 = vmatprep.subr.mxu0 %v1309
    %v1311 = vand.u32 %v101, 4294901760
    %v1312 = vsub.f32 %v101, %v1311
    %v1313 = vand.u32 %v1312, 4294901760
    %1314 = vmatpush1.msra.mxu0 %v1313
    %v1315 = vand.u32 %v104, 4294901760
    %v1316 = vsub.f32 %v104, %v1315
    %v1317 = vand.u32 %v1316, 4294901760
    %1318 = vmatprep.subr.mxu0 %v1317
    %v1319 = vand.u32 %v103, 4294901760
    %v1320 = vsub.f32 %v103, %v1319
    %v1321 = vand.u32 %v1320, 4294901760
    %1322 = vmatpush1.msra.mxu0 %v1321
    %v1323 = vand.u32 %v106, 4294901760
    %v1324 = vsub.f32 %v106, %v1323
    %v1325 = vand.u32 %v1324, 4294901760
    %1326 = vmatprep.subr.mxu0 %v1325
    %v1327 = vand.u32 %v105, 4294901760
    %v1328 = vsub.f32 %v105, %v1327
    %v1329 = vand.u32 %v1328, 4294901760
    %1330 = vmatpush1.msra.mxu0 %v1329
    %v1331 = vand.u32 %v108, 4294901760
    %v1332 = vsub.f32 %v108, %v1331
    %v1333 = vand.u32 %v1332, 4294901760
    %1334 = vmatprep.subr.mxu0 %v1333
    %v1335 = vand.u32 %v107, 4294901760
    %v1336 = vsub.f32 %v107, %v1335
    %v1337 = vand.u32 %v1336, 4294901760
    %1338 = vmatpush1.msra.mxu0 %v1337
    %v1339 = vand.u32 %v110, 4294901760
    %v1340 = vsub.f32 %v110, %v1339
    %v1341 = vand.u32 %v1340, 4294901760
    %1342 = vmatprep.subr.mxu0 %v1341
    %v1343 = vand.u32 %v109, 4294901760
    %v1344 = vsub.f32 %v109, %v1343
    %v1345 = vand.u32 %v1344, 4294901760
    %1346 = vmatpush1.msra.mxu0 %v1345
    %v1347 = vand.u32 %v112, 4294901760
    %v1348 = vsub.f32 %v112, %v1347
    %v1349 = vand.u32 %v1348, 4294901760
    %1350 = vmatprep.subr.mxu0 %v1349
    %v1351 = vand.u32 %v111, 4294901760
    %v1352 = vsub.f32 %v111, %v1351
    %v1353 = vand.u32 %v1352, 4294901760
    %1354 = vmatpush1.msra.mxu0 %v1353
    %v1355 = vand.u32 %v114, 4294901760
    %v1356 = vsub.f32 %v114, %v1355
    %v1357 = vand.u32 %v1356, 4294901760
    %1358 = vmatprep.subr.mxu0 %v1357
    %v1359 = vand.u32 %v113, 4294901760
    %v1360 = vsub.f32 %v113, %v1359
    %v1361 = vand.u32 %v1360, 4294901760
    %1362 = vmatpush1.msra.mxu0 %v1361
    %v1363 = vand.u32 %v44, 4294901760
    %1364 = vmatprep.mubr.f32.mxu0 %v1363
    %v1365 = vand.u32 %v43, 4294901760
    %1366 = vmatmul.mubr.f32.gmra.mrb[0].mxu0 %v1365
    %v1367 = vpop.f32.mrb[0].mxu0
    %v1368 = vadd.f32 %v1091, %v1367
    %v1369 = vpop.f32.mrb[0].mxu0
    %v1370 = vadd.f32 %v1093, %v1369
    %v1371 = vand.u32 %v48, 4294901760
    %1372 = vmatprep.mubr.f32.mxu0 %v1371
    %v1373 = vand.u32 %v47, 4294901760
    %1374 = vmatmul.mubr.f32.gmra.mrb[0].mxu0 %v1373
    %v1375 = vpop.f32.mrb[0].mxu0
    %v1376 = vadd.f32 %v1103, %v1375
    %v1377 = vpop.f32.mrb[0].mxu0
    %v1378 = vadd.f32 %v1105, %v1377
    %1379 = vdwg.mxu0
    %v1380 = vand.u32 %v52, 4294901760
    %1381 = vmatprep.subr.mxu0 %v1380
    %v1382 = vand.u32 %v51, 4294901760
    %1383 = vmatpush1.msra.mxu0 %v1382
    %v1384 = vand.u32 %v54, 4294901760
    %1385 = vmatprep.subr.mxu0 %v1384
    %v1386 = vand.u32 %v53, 4294901760
    %1387 = vmatpush1.msra.mxu0 %v1386
    %v1388 = vand.u32 %v56, 4294901760
    %1389 = vmatprep.subr.mxu0 %v1388
    %v1390 = vand.u32 %v55, 4294901760
    %1391 = vmatpush1.msra.mxu0 %v1390
    %v1392 = vand.u32 %v58, 4294901760
    %1393 = vmatprep.subr.mxu0 %v1392
    %v1394 = vand.u32 %v57, 4294901760
    %1395 = vmatpush1.msra.mxu0 %v1394
    %v1396 = vand.u32 %v60, 4294901760
    %1397 = vmatprep.subr.mxu0 %v1396
    %v1398 = vand.u32 %v59, 4294901760
    %1399 = vmatpush1.msra.mxu0 %v1398
    %v1400 = vand.u32 %v62, 4294901760
    %1401 = vmatprep.subr.mxu0 %v1400
    %v1402 = vand.u32 %v61, 4294901760
    %1403 = vmatpush1.msra.mxu0 %v1402
    %v1404 = vand.u32 %v64, 4294901760
    %1405 = vmatprep.subr.mxu0 %v1404
    %v1406 = vand.u32 %v63, 4294901760
    %1407 = vmatpush1.msra.mxu0 %v1406
    %v1408 = vand.u32 %v66, 4294901760
    %1409 = vmatprep.subr.mxu0 %v1408
    %v1410 = vand.u32 %v65, 4294901760
    %1411 = vmatpush1.msra.mxu0 %v1410
    %v1412 = vand.u32 %v68, 4294901760
    %1413 = vmatprep.subr.mxu0 %v1412
    %v1414 = vand.u32 %v67, 4294901760
    %1415 = vmatpush1.msra.mxu0 %v1414
    %v1416 = vand.u32 %v70, 4294901760
    %1417 = vmatprep.subr.mxu0 %v1416
    %v1418 = vand.u32 %v69, 4294901760
    %1419 = vmatpush1.msra.mxu0 %v1418
    %v1420 = vand.u32 %v72, 4294901760
    %1421 = vmatprep.subr.mxu0 %v1420
    %v1422 = vand.u32 %v71, 4294901760
    %1423 = vmatpush1.msra.mxu0 %v1422
    %v1424 = vand.u32 %v74, 4294901760
    %1425 = vmatprep.subr.mxu0 %v1424
    %v1426 = vand.u32 %v73, 4294901760
    %1427 = vmatpush1.msra.mxu0 %v1426
    %v1428 = vand.u32 %v76, 4294901760
    %1429 = vmatprep.subr.mxu0 %v1428
    %v1430 = vand.u32 %v75, 4294901760
    %1431 = vmatpush1.msra.mxu0 %v1430
    %v1432 = vand.u32 %v78, 4294901760
    %1433 = vmatprep.subr.mxu0 %v1432
    %v1434 = vand.u32 %v77, 4294901760
    %1435 = vmatpush1.msra.mxu0 %v1434
    %v1436 = vand.u32 %v80, 4294901760
    %1437 = vmatprep.subr.mxu0 %v1436
    %v1438 = vand.u32 %v79, 4294901760
    %1439 = vmatpush1.msra.mxu0 %v1438
    %v1440 = vand.u32 %v82, 4294901760
    %1441 = vmatprep.subr.mxu0 %v1440
    %v1442 = vand.u32 %v81, 4294901760
    %1443 = vmatpush1.msra.mxu0 %v1442
    %v1444 = vand.u32 %v84, 4294901760
    %1445 = vmatprep.subr.mxu0 %v1444
    %v1446 = vand.u32 %v83, 4294901760
    %1447 = vmatpush1.msra.mxu0 %v1446
    %v1448 = vand.u32 %v86, 4294901760
    %1449 = vmatprep.subr.mxu0 %v1448
    %v1450 = vand.u32 %v85, 4294901760
    %1451 = vmatpush1.msra.mxu0 %v1450
    %v1452 = vand.u32 %v88, 4294901760
    %1453 = vmatprep.subr.mxu0 %v1452
    %v1454 = vand.u32 %v87, 4294901760
    %1455 = vmatpush1.msra.mxu0 %v1454
    %v1456 = vand.u32 %v90, 4294901760
    %1457 = vmatprep.subr.mxu0 %v1456
    %v1458 = vand.u32 %v89, 4294901760
    %1459 = vmatpush1.msra.mxu0 %v1458
    %v1460 = vand.u32 %v92, 4294901760
    %1461 = vmatprep.subr.mxu0 %v1460
    %v1462 = vand.u32 %v91, 4294901760
    %1463 = vmatpush1.msra.mxu0 %v1462
    %v1464 = vand.u32 %v94, 4294901760
    %1465 = vmatprep.subr.mxu0 %v1464
    %v1466 = vand.u32 %v93, 4294901760
    %1467 = vmatpush1.msra.mxu0 %v1466
    %v1468 = vand.u32 %v96, 4294901760
    %1469 = vmatprep.subr.mxu0 %v1468
    %v1470 = vand.u32 %v95, 4294901760
    %1471 = vmatpush1.msra.mxu0 %v1470
    %v1472 = vand.u32 %v98, 4294901760
    %1473 = vmatprep.subr.mxu0 %v1472
    %v1474 = vand.u32 %v97, 4294901760
    %1475 = vmatpush1.msra.mxu0 %v1474
    %v1476 = vand.u32 %v100, 4294901760
    %1477 = vmatprep.subr.mxu0 %v1476
    %v1478 = vand.u32 %v99, 4294901760
    %1479 = vmatpush1.msra.mxu0 %v1478
    %v1480 = vand.u32 %v102, 4294901760
    %1481 = vmatprep.subr.mxu0 %v1480
    %v1482 = vand.u32 %v101, 4294901760
    %1483 = vmatpush1.msra.mxu0 %v1482
    %v1484 = vand.u32 %v104, 4294901760
    %1485 = vmatprep.subr.mxu0 %v1484
    %v1486 = vand.u32 %v103, 4294901760
    %1487 = vmatpush1.msra.mxu0 %v1486
    %v1488 = vand.u32 %v106, 4294901760
    %1489 = vmatprep.subr.mxu0 %v1488
    %v1490 = vand.u32 %v105, 4294901760
    %1491 = vmatpush1.msra.mxu0 %v1490
    %v1492 = vand.u32 %v108, 4294901760
    %1493 = vmatprep.subr.mxu0 %v1492
    %v1494 = vand.u32 %v107, 4294901760
    %1495 = vmatpush1.msra.mxu0 %v1494
    %v1496 = vand.u32 %v110, 4294901760
    %1497 = vmatprep.subr.mxu0 %v1496
    %v1498 = vand.u32 %v109, 4294901760
    %1499 = vmatpush1.msra.mxu0 %v1498
    %v1500 = vand.u32 %v112, 4294901760
    %1501 = vmatprep.subr.mxu0 %v1500
    %v1502 = vand.u32 %v111, 4294901760
    %1503 = vmatpush1.msra.mxu0 %v1502
    %v1504 = vand.u32 %v114, 4294901760
    %1505 = vmatprep.subr.mxu0 %v1504
    %v1506 = vand.u32 %v113, 4294901760
    %1507 = vmatpush1.msra.mxu0 %v1506
    %v1508 = vand.u32 %v44, 4294901760
    %1509 = vmatprep.mubr.f32.mxu0 %v1508
    %v1510 = vand.u32 %v43, 4294901760
    %1511 = vmatmul.mubr.f32.gmra.mrb[0].mxu0 %v1510
    %v1512 = vpop.f32.mrb[0].mxu0
    %v1513 = vadd.f32 %v1368, %v1512
    %v1514 = vpop.f32.mrb[0].mxu0
    %v1515 = vadd.f32 %v1370, %v1514
    %v1516 = vand.u32 %v48, 4294901760
    %1517 = vmatprep.mubr.f32.mxu0 %v1516
    %v1518 = vand.u32 %v47, 4294901760
    %1519 = vmatmul.mubr.f32.gmra.mrb[0].mxu0 %v1518
    %v1520 = vpop.f32.mrb[0].mxu0
    %v1521 = vadd.f32 %v1376, %v1520
    %v1522 = vpop.f32.mrb[0].mxu0
    %v1523 = vadd.f32 %v1378, %v1522
    %1524 = vdwg.mxu0
    %v1525 = vand.u32 %v116, 4294901760
    %1526 = vmatprep.subr.mxu0 %v1525
    %v1527 = vand.u32 %v115, 4294901760
    %1528 = vmatpush1.msra.mxu0 %v1527
    %v1529 = vand.u32 %v118, 4294901760
    %1530 = vmatprep.subr.mxu0 %v1529
    %v1531 = vand.u32 %v117, 4294901760
    %1532 = vmatpush1.msra.mxu0 %v1531
    %v1533 = vand.u32 %v120, 4294901760
    %1534 = vmatprep.subr.mxu0 %v1533
    %v1535 = vand.u32 %v119, 4294901760
    %1536 = vmatpush1.msra.mxu0 %v1535
    %v1537 = vand.u32 %v122, 4294901760
    %1538 = vmatprep.subr.mxu0 %v1537
    %v1539 = vand.u32 %v121, 4294901760
    %1540 = vmatpush1.msra.mxu0 %v1539
    %v1541 = vand.u32 %v124, 4294901760
    %1542 = vmatprep.subr.mxu0 %v1541
    %v1543 = vand.u32 %v123, 4294901760
    %1544 = vmatpush1.msra.mxu0 %v1543
    %v1545 = vand.u32 %v126, 4294901760
    %1546 = vmatprep.subr.mxu0 %v1545
    %v1547 = vand.u32 %v125, 4294901760
    %1548 = vmatpush1.msra.mxu0 %v1547
    %v1549 = vand.u32 %v128, 4294901760
    %1550 = vmatprep.subr.mxu0 %v1549
    %v1551 = vand.u32 %v127, 4294901760
    %1552 = vmatpush1.msra.mxu0 %v1551
    %v1553 = vand.u32 %v130, 4294901760
    %1554 = vmatprep.subr.mxu0 %v1553
    %v1555 = vand.u32 %v129, 4294901760
    %1556 = vmatpush1.msra.mxu0 %v1555
    %v1557 = vand.u32 %v132, 4294901760
    %1558 = vmatprep.subr.mxu0 %v1557
    %v1559 = vand.u32 %v131, 4294901760
    %1560 = vmatpush1.msra.mxu0 %v1559
    %v1561 = vand.u32 %v134, 4294901760
    %1562 = vmatprep.subr.mxu0 %v1561
    %v1563 = vand.u32 %v133, 4294901760
    %1564 = vmatpush1.msra.mxu0 %v1563
    %v1565 = vand.u32 %v136, 4294901760
    %1566 = vmatprep.subr.mxu0 %v1565
    %v1567 = vand.u32 %v135, 4294901760
    %1568 = vmatpush1.msra.mxu0 %v1567
    %v1569 = vand.u32 %v138, 4294901760
    %1570 = vmatprep.subr.mxu0 %v1569
    %v1571 = vand.u32 %v137, 4294901760
    %1572 = vmatpush1.msra.mxu0 %v1571
    %v1573 = vand.u32 %v140, 4294901760
    %1574 = vmatprep.subr.mxu0 %v1573
    %v1575 = vand.u32 %v139, 4294901760
    %1576 = vmatpush1.msra.mxu0 %v1575
    %v1577 = vand.u32 %v142, 4294901760
    %1578 = vmatprep.subr.mxu0 %v1577
    %v1579 = vand.u32 %v141, 4294901760
    %1580 = vmatpush1.msra.mxu0 %v1579
    %v1581 = vand.u32 %v144, 4294901760
    %1582 = vmatprep.subr.mxu0 %v1581
    %v1583 = vand.u32 %v143, 4294901760
    %1584 = vmatpush1.msra.mxu0 %v1583
    %v1585 = vand.u32 %v146, 4294901760
    %1586 = vmatprep.subr.mxu0 %v1585
    %v1587 = vand.u32 %v145, 4294901760
    %1588 = vmatpush1.msra.mxu0 %v1587
    %v1589 = vand.u32 %v148, 4294901760
    %1590 = vmatprep.subr.mxu0 %v1589
    %v1591 = vand.u32 %v147, 4294901760
    %1592 = vmatpush1.msra.mxu0 %v1591
    %v1593 = vand.u32 %v150, 4294901760
    %1594 = vmatprep.subr.mxu0 %v1593
    %v1595 = vand.u32 %v149, 4294901760
    %1596 = vmatpush1.msra.mxu0 %v1595
    %v1597 = vand.u32 %v152, 4294901760
    %1598 = vmatprep.subr.mxu0 %v1597
    %v1599 = vand.u32 %v151, 4294901760
    %1600 = vmatpush1.msra.mxu0 %v1599
    %v1601 = vand.u32 %v154, 4294901760
    %1602 = vmatprep.subr.mxu0 %v1601
    %v1603 = vand.u32 %v153, 4294901760
    %1604 = vmatpush1.msra.mxu0 %v1603
    %v1605 = vand.u32 %v156, 4294901760
    %1606 = vmatprep.subr.mxu0 %v1605
    %v1607 = vand.u32 %v155, 4294901760
    %1608 = vmatpush1.msra.mxu0 %v1607
    %v1609 = vand.u32 %v158, 4294901760
    %1610 = vmatprep.subr.mxu0 %v1609
    %v1611 = vand.u32 %v157, 4294901760
    %1612 = vmatpush1.msra.mxu0 %v1611
    %v1613 = vand.u32 %v160, 4294901760
    %1614 = vmatprep.subr.mxu0 %v1613
    %v1615 = vand.u32 %v159, 4294901760
    %1616 = vmatpush1.msra.mxu0 %v1615
    %v1617 = vand.u32 %v162, 4294901760
    %1618 = vmatprep.subr.mxu0 %v1617
    %v1619 = vand.u32 %v161, 4294901760
    %1620 = vmatpush1.msra.mxu0 %v1619
    %v1621 = vand.u32 %v164, 4294901760
    %1622 = vmatprep.subr.mxu0 %v1621
    %v1623 = vand.u32 %v163, 4294901760
    %1624 = vmatpush1.msra.mxu0 %v1623
    %v1625 = vand.u32 %v166, 4294901760
    %1626 = vmatprep.subr.mxu0 %v1625
    %v1627 = vand.u32 %v165, 4294901760
    %1628 = vmatpush1.msra.mxu0 %v1627
    %v1629 = vand.u32 %v168, 4294901760
    %1630 = vmatprep.subr.mxu0 %v1629
    %v1631 = vand.u32 %v167, 4294901760
    %1632 = vmatpush1.msra.mxu0 %v1631
    %v1633 = vand.u32 %v170, 4294901760
    %1634 = vmatprep.subr.mxu0 %v1633
    %v1635 = vand.u32 %v169, 4294901760
    %1636 = vmatpush1.msra.mxu0 %v1635
    %v1637 = vand.u32 %v172, 4294901760
    %1638 = vmatprep.subr.mxu0 %v1637
    %v1639 = vand.u32 %v171, 4294901760
    %1640 = vmatpush1.msra.mxu0 %v1639
    %v1641 = vand.u32 %v174, 4294901760
    %1642 = vmatprep.subr.mxu0 %v1641
    %v1643 = vand.u32 %v173, 4294901760
    %1644 = vmatpush1.msra.mxu0 %v1643
    %v1645 = vand.u32 %v176, 4294901760
    %1646 = vmatprep.subr.mxu0 %v1645
    %v1647 = vand.u32 %v175, 4294901760
    %1648 = vmatpush1.msra.mxu0 %v1647
    %v1649 = vand.u32 %v178, 4294901760
    %1650 = vmatprep.subr.mxu0 %v1649
    %v1651 = vand.u32 %v177, 4294901760
    %1652 = vmatpush1.msra.mxu0 %v1651
    %v1653 = vand.u32 %v46, 4294901760
    %v1654 = vsub.f32 %v46, %v1653
    %v1655 = vand.u32 %v1654, 4294901760
    %v1656 = vsub.f32 %v1654, %v1655
    %v1657 = vand.u32 %v1656, 4294901760
    %1658 = vmatprep.mubr.f32.mxu0 %v1657
    %v1659 = vand.u32 %v45, 4294901760
    %v1660 = vsub.f32 %v45, %v1659
    %v1661 = vand.u32 %v1660, 4294901760
    %v1662 = vsub.f32 %v1660, %v1661
    %v1663 = vand.u32 %v1662, 4294901760
    %1664 = vmatmul.mubr.f32.gmra.mrb[0].mxu0 %v1663
    %v1665 = vpop.f32.mrb[0].mxu0
    %v1666 = vadd.f32 %v1513, %v1665
    %v1667 = vpop.f32.mrb[0].mxu0
    %v1668 = vadd.f32 %v1515, %v1667
    %v1669 = vand.u32 %v50, 4294901760
    %v1670 = vsub.f32 %v50, %v1669
    %v1671 = vand.u32 %v1670, 4294901760
    %v1672 = vsub.f32 %v1670, %v1671
    %v1673 = vand.u32 %v1672, 4294901760
    %1674 = vmatprep.mubr.f32.mxu0 %v1673
    %v1675 = vand.u32 %v49, 4294901760
    %v1676 = vsub.f32 %v49, %v1675
    %v1677 = vand.u32 %v1676, 4294901760
    %v1678 = vsub.f32 %v1676, %v1677
    %v1679 = vand.u32 %v1678, 4294901760
    %1680 = vmatmul.mubr.f32.gmra.mrb[0].mxu0 %v1679
    %v1681 = vpop.f32.mrb[0].mxu0
    %v1682 = vadd.f32 %v1521, %v1681
    %v1683 = vpop.f32.mrb[0].mxu0
    %v1684 = vadd.f32 %v1523, %v1683
    %1685 = vdwg.mxu0
    %v1686 = vand.u32 %v116, 4294901760
    %v1687 = vsub.f32 %v116, %v1686
    %v1688 = vand.u32 %v1687, 4294901760
    %v1689 = vsub.f32 %v1687, %v1688
    %v1690 = vand.u32 %v1689, 4294901760
    %1691 = vmatprep.subr.mxu0 %v1690
    %v1692 = vand.u32 %v115, 4294901760
    %v1693 = vsub.f32 %v115, %v1692
    %v1694 = vand.u32 %v1693, 4294901760
    %v1695 = vsub.f32 %v1693, %v1694
    %v1696 = vand.u32 %v1695, 4294901760
    %1697 = vmatpush1.msra.mxu0 %v1696
    %v1698 = vand.u32 %v118, 4294901760
    %v1699 = vsub.f32 %v118, %v1698
    %v1700 = vand.u32 %v1699, 4294901760
    %v1701 = vsub.f32 %v1699, %v1700
    %v1702 = vand.u32 %v1701, 4294901760
    %1703 = vmatprep.subr.mxu0 %v1702
    %v1704 = vand.u32 %v117, 4294901760
    %v1705 = vsub.f32 %v117, %v1704
    %v1706 = vand.u32 %v1705, 4294901760
    %v1707 = vsub.f32 %v1705, %v1706
    %v1708 = vand.u32 %v1707, 4294901760
    %1709 = vmatpush1.msra.mxu0 %v1708
    %v1710 = vand.u32 %v120, 4294901760
    %v1711 = vsub.f32 %v120, %v1710
    %v1712 = vand.u32 %v1711, 4294901760
    %v1713 = vsub.f32 %v1711, %v1712
    %v1714 = vand.u32 %v1713, 4294901760
    %1715 = vmatprep.subr.mxu0 %v1714
    %v1716 = vand.u32 %v119, 4294901760
    %v1717 = vsub.f32 %v119, %v1716
    %v1718 = vand.u32 %v1717, 4294901760
    %v1719 = vsub.f32 %v1717, %v1718
    %v1720 = vand.u32 %v1719, 4294901760
    %1721 = vmatpush1.msra.mxu0 %v1720
    %v1722 = vand.u32 %v122, 4294901760
    %v1723 = vsub.f32 %v122, %v1722
    %v1724 = vand.u32 %v1723, 4294901760
    %v1725 = vsub.f32 %v1723, %v1724
    %v1726 = vand.u32 %v1725, 4294901760
    %1727 = vmatprep.subr.mxu0 %v1726
    %v1728 = vand.u32 %v121, 4294901760
    %v1729 = vsub.f32 %v121, %v1728
    %v1730 = vand.u32 %v1729, 4294901760
    %v1731 = vsub.f32 %v1729, %v1730
    %v1732 = vand.u32 %v1731, 4294901760
    %1733 = vmatpush1.msra.mxu0 %v1732
    %v1734 = vand.u32 %v124, 4294901760
    %v1735 = vsub.f32 %v124, %v1734
    %v1736 = vand.u32 %v1735, 4294901760
    %v1737 = vsub.f32 %v1735, %v1736
    %v1738 = vand.u32 %v1737, 4294901760
    %1739 = vmatprep.subr.mxu0 %v1738
    %v1740 = vand.u32 %v123, 4294901760
    %v1741 = vsub.f32 %v123, %v1740
    %v1742 = vand.u32 %v1741, 4294901760
    %v1743 = vsub.f32 %v1741, %v1742
    %v1744 = vand.u32 %v1743, 4294901760
    %1745 = vmatpush1.msra.mxu0 %v1744
    %v1746 = vand.u32 %v126, 4294901760
    %v1747 = vsub.f32 %v126, %v1746
    %v1748 = vand.u32 %v1747, 4294901760
    %v1749 = vsub.f32 %v1747, %v1748
    %v1750 = vand.u32 %v1749, 4294901760
    %1751 = vmatprep.subr.mxu0 %v1750
    %v1752 = vand.u32 %v125, 4294901760
    %v1753 = vsub.f32 %v125, %v1752
    %v1754 = vand.u32 %v1753, 4294901760
    %v1755 = vsub.f32 %v1753, %v1754
    %v1756 = vand.u32 %v1755, 4294901760
    %1757 = vmatpush1.msra.mxu0 %v1756
    %v1758 = vand.u32 %v128, 4294901760
    %v1759 = vsub.f32 %v128, %v1758
    %v1760 = vand.u32 %v1759, 4294901760
    %v1761 = vsub.f32 %v1759, %v1760
    %v1762 = vand.u32 %v1761, 4294901760
    %1763 = vmatprep.subr.mxu0 %v1762
    %v1764 = vand.u32 %v127, 4294901760
    %v1765 = vsub.f32 %v127, %v1764
    %v1766 = vand.u32 %v1765, 4294901760
    %v1767 = vsub.f32 %v1765, %v1766
    %v1768 = vand.u32 %v1767, 4294901760
    %1769 = vmatpush1.msra.mxu0 %v1768
    %v1770 = vand.u32 %v130, 4294901760
    %v1771 = vsub.f32 %v130, %v1770
    %v1772 = vand.u32 %v1771, 4294901760
    %v1773 = vsub.f32 %v1771, %v1772
    %v1774 = vand.u32 %v1773, 4294901760
    %1775 = vmatprep.subr.mxu0 %v1774
    %v1776 = vand.u32 %v129, 4294901760
    %v1777 = vsub.f32 %v129, %v1776
    %v1778 = vand.u32 %v1777, 4294901760
    %v1779 = vsub.f32 %v1777, %v1778
    %v1780 = vand.u32 %v1779, 4294901760
    %1781 = vmatpush1.msra.mxu0 %v1780
    %v1782 = vand.u32 %v132, 4294901760
    %v1783 = vsub.f32 %v132, %v1782
    %v1784 = vand.u32 %v1783, 4294901760
    %v1785 = vsub.f32 %v1783, %v1784
    %v1786 = vand.u32 %v1785, 4294901760
    %1787 = vmatprep.subr.mxu0 %v1786
    %v1788 = vand.u32 %v131, 4294901760
    %v1789 = vsub.f32 %v131, %v1788
    %v1790 = vand.u32 %v1789, 4294901760
    %v1791 = vsub.f32 %v1789, %v1790
    %v1792 = vand.u32 %v1791, 4294901760
    %1793 = vmatpush1.msra.mxu0 %v1792
    %v1794 = vand.u32 %v134, 4294901760
    %v1795 = vsub.f32 %v134, %v1794
    %v1796 = vand.u32 %v1795, 4294901760
    %v1797 = vsub.f32 %v1795, %v1796
    %v1798 = vand.u32 %v1797, 4294901760
    %1799 = vmatprep.subr.mxu0 %v1798
    %v1800 = vand.u32 %v133, 4294901760
    %v1801 = vsub.f32 %v133, %v1800
    %v1802 = vand.u32 %v1801, 4294901760
    %v1803 = vsub.f32 %v1801, %v1802
    %v1804 = vand.u32 %v1803, 4294901760
    %1805 = vmatpush1.msra.mxu0 %v1804
    %v1806 = vand.u32 %v136, 4294901760
    %v1807 = vsub.f32 %v136, %v1806
    %v1808 = vand.u32 %v1807, 4294901760
    %v1809 = vsub.f32 %v1807, %v1808
    %v1810 = vand.u32 %v1809, 4294901760
    %1811 = vmatprep.subr.mxu0 %v1810
    %v1812 = vand.u32 %v135, 4294901760
    %v1813 = vsub.f32 %v135, %v1812
    %v1814 = vand.u32 %v1813, 4294901760
    %v1815 = vsub.f32 %v1813, %v1814
    %v1816 = vand.u32 %v1815, 4294901760
    %1817 = vmatpush1.msra.mxu0 %v1816
    %v1818 = vand.u32 %v138, 4294901760
    %v1819 = vsub.f32 %v138, %v1818
    %v1820 = vand.u32 %v1819, 4294901760
    %v1821 = vsub.f32 %v1819, %v1820
    %v1822 = vand.u32 %v1821, 4294901760
    %1823 = vmatprep.subr.mxu0 %v1822
    %v1824 = vand.u32 %v137, 4294901760
    %v1825 = vsub.f32 %v137, %v1824
    %v1826 = vand.u32 %v1825, 4294901760
    %v1827 = vsub.f32 %v1825, %v1826
    %v1828 = vand.u32 %v1827, 4294901760
    %1829 = vmatpush1.msra.mxu0 %v1828
    %v1830 = vand.u32 %v140, 4294901760
    %v1831 = vsub.f32 %v140, %v1830
    %v1832 = vand.u32 %v1831, 4294901760
    %v1833 = vsub.f32 %v1831, %v1832
    %v1834 = vand.u32 %v1833, 4294901760
    %1835 = vmatprep.subr.mxu0 %v1834
    %v1836 = vand.u32 %v139, 4294901760
    %v1837 = vsub.f32 %v139, %v1836
    %v1838 = vand.u32 %v1837, 4294901760
    %v1839 = vsub.f32 %v1837, %v1838
    %v1840 = vand.u32 %v1839, 4294901760
    %1841 = vmatpush1.msra.mxu0 %v1840
    %v1842 = vand.u32 %v142, 4294901760
    %v1843 = vsub.f32 %v142, %v1842
    %v1844 = vand.u32 %v1843, 4294901760
    %v1845 = vsub.f32 %v1843, %v1844
    %v1846 = vand.u32 %v1845, 4294901760
    %1847 = vmatprep.subr.mxu0 %v1846
    %v1848 = vand.u32 %v141, 4294901760
    %v1849 = vsub.f32 %v141, %v1848
    %v1850 = vand.u32 %v1849, 4294901760
    %v1851 = vsub.f32 %v1849, %v1850
    %v1852 = vand.u32 %v1851, 4294901760
    %1853 = vmatpush1.msra.mxu0 %v1852
    %v1854 = vand.u32 %v144, 4294901760
    %v1855 = vsub.f32 %v144, %v1854
    %v1856 = vand.u32 %v1855, 4294901760
    %v1857 = vsub.f32 %v1855, %v1856
    %v1858 = vand.u32 %v1857, 4294901760
    %1859 = vmatprep.subr.mxu0 %v1858
    %v1860 = vand.u32 %v143, 4294901760
    %v1861 = vsub.f32 %v143, %v1860
    %v1862 = vand.u32 %v1861, 4294901760
    %v1863 = vsub.f32 %v1861, %v1862
    %v1864 = vand.u32 %v1863, 4294901760
    %1865 = vmatpush1.msra.mxu0 %v1864
    %v1866 = vand.u32 %v146, 4294901760
    %v1867 = vsub.f32 %v146, %v1866
    %v1868 = vand.u32 %v1867, 4294901760
    %v1869 = vsub.f32 %v1867, %v1868
    %v1870 = vand.u32 %v1869, 4294901760
    %1871 = vmatprep.subr.mxu0 %v1870
    %v1872 = vand.u32 %v145, 4294901760
    %v1873 = vsub.f32 %v145, %v1872
    %v1874 = vand.u32 %v1873, 4294901760
    %v1875 = vsub.f32 %v1873, %v1874
    %v1876 = vand.u32 %v1875, 4294901760
    %1877 = vmatpush1.msra.mxu0 %v1876
    %v1878 = vand.u32 %v148, 4294901760
    %v1879 = vsub.f32 %v148, %v1878
    %v1880 = vand.u32 %v1879, 4294901760
    %v1881 = vsub.f32 %v1879, %v1880
    %v1882 = vand.u32 %v1881, 4294901760
    %1883 = vmatprep.subr.mxu0 %v1882
    %v1884 = vand.u32 %v147, 4294901760
    %v1885 = vsub.f32 %v147, %v1884
    %v1886 = vand.u32 %v1885, 4294901760
    %v1887 = vsub.f32 %v1885, %v1886
    %v1888 = vand.u32 %v1887, 4294901760
    %1889 = vmatpush1.msra.mxu0 %v1888
    %v1890 = vand.u32 %v150, 4294901760
    %v1891 = vsub.f32 %v150, %v1890
    %v1892 = vand.u32 %v1891, 4294901760
    %v1893 = vsub.f32 %v1891, %v1892
    %v1894 = vand.u32 %v1893, 4294901760
    %1895 = vmatprep.subr.mxu0 %v1894
    %v1896 = vand.u32 %v149, 4294901760
    %v1897 = vsub.f32 %v149, %v1896
    %v1898 = vand.u32 %v1897, 4294901760
    %v1899 = vsub.f32 %v1897, %v1898
    %v1900 = vand.u32 %v1899, 4294901760
    %1901 = vmatpush1.msra.mxu0 %v1900
    %v1902 = vand.u32 %v152, 4294901760
    %v1903 = vsub.f32 %v152, %v1902
    %v1904 = vand.u32 %v1903, 4294901760
    %v1905 = vsub.f32 %v1903, %v1904
    %v1906 = vand.u32 %v1905, 4294901760
    %1907 = vmatprep.subr.mxu0 %v1906
    %v1908 = vand.u32 %v151, 4294901760
    %v1909 = vsub.f32 %v151, %v1908
    %v1910 = vand.u32 %v1909, 4294901760
    %v1911 = vsub.f32 %v1909, %v1910
    %v1912 = vand.u32 %v1911, 4294901760
    %1913 = vmatpush1.msra.mxu0 %v1912
    %v1914 = vand.u32 %v154, 4294901760
    %v1915 = vsub.f32 %v154, %v1914
    %v1916 = vand.u32 %v1915, 4294901760
    %v1917 = vsub.f32 %v1915, %v1916
    %v1918 = vand.u32 %v1917, 4294901760
    %1919 = vmatprep.subr.mxu0 %v1918
    %v1920 = vand.u32 %v153, 4294901760
    %v1921 = vsub.f32 %v153, %v1920
    %v1922 = vand.u32 %v1921, 4294901760
    %v1923 = vsub.f32 %v1921, %v1922
    %v1924 = vand.u32 %v1923, 4294901760
    %1925 = vmatpush1.msra.mxu0 %v1924
    %v1926 = vand.u32 %v156, 4294901760
    %v1927 = vsub.f32 %v156, %v1926
    %v1928 = vand.u32 %v1927, 4294901760
    %v1929 = vsub.f32 %v1927, %v1928
    %v1930 = vand.u32 %v1929, 4294901760
    %1931 = vmatprep.subr.mxu0 %v1930
    %v1932 = vand.u32 %v155, 4294901760
    %v1933 = vsub.f32 %v155, %v1932
    %v1934 = vand.u32 %v1933, 4294901760
    %v1935 = vsub.f32 %v1933, %v1934
    %v1936 = vand.u32 %v1935, 4294901760
    %1937 = vmatpush1.msra.mxu0 %v1936
    %v1938 = vand.u32 %v158, 4294901760
    %v1939 = vsub.f32 %v158, %v1938
    %v1940 = vand.u32 %v1939, 4294901760
    %v1941 = vsub.f32 %v1939, %v1940
    %v1942 = vand.u32 %v1941, 4294901760
    %1943 = vmatprep.subr.mxu0 %v1942
    %v1944 = vand.u32 %v157, 4294901760
    %v1945 = vsub.f32 %v157, %v1944
    %v1946 = vand.u32 %v1945, 4294901760
    %v1947 = vsub.f32 %v1945, %v1946
    %v1948 = vand.u32 %v1947, 4294901760
    %1949 = vmatpush1.msra.mxu0 %v1948
    %v1950 = vand.u32 %v160, 4294901760
    %v1951 = vsub.f32 %v160, %v1950
    %v1952 = vand.u32 %v1951, 4294901760
    %v1953 = vsub.f32 %v1951, %v1952
    %v1954 = vand.u32 %v1953, 4294901760
    %1955 = vmatprep.subr.mxu0 %v1954
    %v1956 = vand.u32 %v159, 4294901760
    %v1957 = vsub.f32 %v159, %v1956
    %v1958 = vand.u32 %v1957, 4294901760
    %v1959 = vsub.f32 %v1957, %v1958
    %v1960 = vand.u32 %v1959, 4294901760
    %1961 = vmatpush1.msra.mxu0 %v1960
    %v1962 = vand.u32 %v162, 4294901760
    %v1963 = vsub.f32 %v162, %v1962
    %v1964 = vand.u32 %v1963, 4294901760
    %v1965 = vsub.f32 %v1963, %v1964
    %v1966 = vand.u32 %v1965, 4294901760
    %1967 = vmatprep.subr.mxu0 %v1966
    %v1968 = vand.u32 %v161, 4294901760
    %v1969 = vsub.f32 %v161, %v1968
    %v1970 = vand.u32 %v1969, 4294901760
    %v1971 = vsub.f32 %v1969, %v1970
    %v1972 = vand.u32 %v1971, 4294901760
    %1973 = vmatpush1.msra.mxu0 %v1972
    %v1974 = vand.u32 %v164, 4294901760
    %v1975 = vsub.f32 %v164, %v1974
    %v1976 = vand.u32 %v1975, 4294901760
    %v1977 = vsub.f32 %v1975, %v1976
    %v1978 = vand.u32 %v1977, 4294901760
    %1979 = vmatprep.subr.mxu0 %v1978
    %v1980 = vand.u32 %v163, 4294901760
    %v1981 = vsub.f32 %v163, %v1980
    %v1982 = vand.u32 %v1981, 4294901760
    %v1983 = vsub.f32 %v1981, %v1982
    %v1984 = vand.u32 %v1983, 4294901760
    %1985 = vmatpush1.msra.mxu0 %v1984
    %v1986 = vand.u32 %v166, 4294901760
    %v1987 = vsub.f32 %v166, %v1986
    %v1988 = vand.u32 %v1987, 4294901760
    %v1989 = vsub.f32 %v1987, %v1988
    %v1990 = vand.u32 %v1989, 4294901760
    %1991 = vmatprep.subr.mxu0 %v1990
    %v1992 = vand.u32 %v165, 4294901760
    %v1993 = vsub.f32 %v165, %v1992
    %v1994 = vand.u32 %v1993, 4294901760
    %v1995 = vsub.f32 %v1993, %v1994
    %v1996 = vand.u32 %v1995, 4294901760
    %1997 = vmatpush1.msra.mxu0 %v1996
    %v1998 = vand.u32 %v168, 4294901760
    %v1999 = vsub.f32 %v168, %v1998
    %v2000 = vand.u32 %v1999, 4294901760
    %v2001 = vsub.f32 %v1999, %v2000
    %v2002 = vand.u32 %v2001, 4294901760
    %2003 = vmatprep.subr.mxu0 %v2002
    %v2004 = vand.u32 %v167, 4294901760
    %v2005 = vsub.f32 %v167, %v2004
    %v2006 = vand.u32 %v2005, 4294901760
    %v2007 = vsub.f32 %v2005, %v2006
    %v2008 = vand.u32 %v2007, 4294901760
    %2009 = vmatpush1.msra.mxu0 %v2008
    %v2010 = vand.u32 %v170, 4294901760
    %v2011 = vsub.f32 %v170, %v2010
    %v2012 = vand.u32 %v2011, 4294901760
    %v2013 = vsub.f32 %v2011, %v2012
    %v2014 = vand.u32 %v2013, 4294901760
    %2015 = vmatprep.subr.mxu0 %v2014
    %v2016 = vand.u32 %v169, 4294901760
    %v2017 = vsub.f32 %v169, %v2016
    %v2018 = vand.u32 %v2017, 4294901760
    %v2019 = vsub.f32 %v2017, %v2018
    %v2020 = vand.u32 %v2019, 4294901760
    %2021 = vmatpush1.msra.mxu0 %v2020
    %v2022 = vand.u32 %v172, 4294901760
    %v2023 = vsub.f32 %v172, %v2022
    %v2024 = vand.u32 %v2023, 4294901760
    %v2025 = vsub.f32 %v2023, %v2024
    %v2026 = vand.u32 %v2025, 4294901760
    %2027 = vmatprep.subr.mxu0 %v2026
    %v2028 = vand.u32 %v171, 4294901760
    %v2029 = vsub.f32 %v171, %v2028
    %v2030 = vand.u32 %v2029, 4294901760
    %v2031 = vsub.f32 %v2029, %v2030
    %v2032 = vand.u32 %v2031, 4294901760
    %2033 = vmatpush1.msra.mxu0 %v2032
    %v2034 = vand.u32 %v174, 4294901760
    %v2035 = vsub.f32 %v174, %v2034
    %v2036 = vand.u32 %v2035, 4294901760
    %v2037 = vsub.f32 %v2035, %v2036
    %v2038 = vand.u32 %v2037, 4294901760
    %2039 = vmatprep.subr.mxu0 %v2038
    %v2040 = vand.u32 %v173, 4294901760
    %v2041 = vsub.f32 %v173, %v2040
    %v2042 = vand.u32 %v2041, 4294901760
    %v2043 = vsub.f32 %v2041, %v2042
    %v2044 = vand.u32 %v2043, 4294901760
    %2045 = vmatpush1.msra.mxu0 %v2044
    %v2046 = vand.u32 %v176, 4294901760
    %v2047 = vsub.f32 %v176, %v2046
    %v2048 = vand.u32 %v2047, 4294901760
    %v2049 = vsub.f32 %v2047, %v2048
    %v2050 = vand.u32 %v2049, 4294901760
    %2051 = vmatprep.subr.mxu0 %v2050
    %v2052 = vand.u32 %v175, 4294901760
    %v2053 = vsub.f32 %v175, %v2052
    %v2054 = vand.u32 %v2053, 4294901760
    %v2055 = vsub.f32 %v2053, %v2054
    %v2056 = vand.u32 %v2055, 4294901760
    %2057 = vmatpush1.msra.mxu0 %v2056
    %v2058 = vand.u32 %v178, 4294901760
    %v2059 = vsub.f32 %v178, %v2058
    %v2060 = vand.u32 %v2059, 4294901760
    %v2061 = vsub.f32 %v2059, %v2060
    %v2062 = vand.u32 %v2061, 4294901760
    %2063 = vmatprep.subr.mxu0 %v2062
    %v2064 = vand.u32 %v177, 4294901760
    %v2065 = vsub.f32 %v177, %v2064
    %v2066 = vand.u32 %v2065, 4294901760
    %v2067 = vsub.f32 %v2065, %v2066
    %v2068 = vand.u32 %v2067, 4294901760
    %2069 = vmatpush1.msra.mxu0 %v2068
    %v2070 = vand.u32 %v46, 4294901760
    %2071 = vmatprep.mubr.f32.mxu0 %v2070
    %v2072 = vand.u32 %v45, 4294901760
    %2073 = vmatmul.mubr.f32.gmra.mrb[0].mxu0 %v2072
    %v2074 = vpop.f32.mrb[0].mxu0
    %v2075 = vadd.f32 %v1666, %v2074
    %v2076 = vpop.f32.mrb[0].mxu0
    %v2077 = vadd.f32 %v1668, %v2076
    %v2078 = vand.u32 %v50, 4294901760
    %2079 = vmatprep.mubr.f32.mxu0 %v2078
    %v2080 = vand.u32 %v49, 4294901760
    %2081 = vmatmul.mubr.f32.gmra.mrb[0].mxu0 %v2080
    %v2082 = vpop.f32.mrb[0].mxu0
    %v2083 = vadd.f32 %v1682, %v2082
    %v2084 = vpop.f32.mrb[0].mxu0
    %v2085 = vadd.f32 %v1684, %v2084
    %2086 = vdwg.mxu0
    %v2087 = vand.u32 %v116, 4294901760
    %v2088 = vsub.f32 %v116, %v2087
    %2089 = vmatprep.subr.mxu0 %v2088
    %v2090 = vand.u32 %v115, 4294901760
    %v2091 = vsub.f32 %v115, %v2090
    %2092 = vmatpush1.msra.mxu0 %v2091
    %v2093 = vand.u32 %v118, 4294901760
    %v2094 = vsub.f32 %v118, %v2093
    %2095 = vmatprep.subr.mxu0 %v2094
    %v2096 = vand.u32 %v117, 4294901760
    %v2097 = vsub.f32 %v117, %v2096
    %2098 = vmatpush1.msra.mxu0 %v2097
    %v2099 = vand.u32 %v120, 4294901760
    %v2100 = vsub.f32 %v120, %v2099
    %2101 = vmatprep.subr.mxu0 %v2100
    %v2102 = vand.u32 %v119, 4294901760
    %v2103 = vsub.f32 %v119, %v2102
    %2104 = vmatpush1.msra.mxu0 %v2103
    %v2105 = vand.u32 %v122, 4294901760
    %v2106 = vsub.f32 %v122, %v2105
    %2107 = vmatprep.subr.mxu0 %v2106
    %v2108 = vand.u32 %v121, 4294901760
    %v2109 = vsub.f32 %v121, %v2108
    %2110 = vmatpush1.msra.mxu0 %v2109
    %v2111 = vand.u32 %v124, 4294901760
    %v2112 = vsub.f32 %v124, %v2111
    %2113 = vmatprep.subr.mxu0 %v2112
    %v2114 = vand.u32 %v123, 4294901760
    %v2115 = vsub.f32 %v123, %v2114
    %2116 = vmatpush1.msra.mxu0 %v2115
    %v2117 = vand.u32 %v126, 4294901760
    %v2118 = vsub.f32 %v126, %v2117
    %2119 = vmatprep.subr.mxu0 %v2118
    %v2120 = vand.u32 %v125, 4294901760
    %v2121 = vsub.f32 %v125, %v2120
    %2122 = vmatpush1.msra.mxu0 %v2121
    %v2123 = vand.u32 %v128, 4294901760
    %v2124 = vsub.f32 %v128, %v2123
    %2125 = vmatprep.subr.mxu0 %v2124
    %v2126 = vand.u32 %v127, 4294901760
    %v2127 = vsub.f32 %v127, %v2126
    %2128 = vmatpush1.msra.mxu0 %v2127
    %v2129 = vand.u32 %v130, 4294901760
    %v2130 = vsub.f32 %v130, %v2129
    %2131 = vmatprep.subr.mxu0 %v2130
    %v2132 = vand.u32 %v129, 4294901760
    %v2133 = vsub.f32 %v129, %v2132
    %2134 = vmatpush1.msra.mxu0 %v2133
    %v2135 = vand.u32 %v132, 4294901760
    %v2136 = vsub.f32 %v132, %v2135
    %2137 = vmatprep.subr.mxu0 %v2136
    %v2138 = vand.u32 %v131, 4294901760
    %v2139 = vsub.f32 %v131, %v2138
    %2140 = vmatpush1.msra.mxu0 %v2139
    %v2141 = vand.u32 %v134, 4294901760
    %v2142 = vsub.f32 %v134, %v2141
    %2143 = vmatprep.subr.mxu0 %v2142
    %v2144 = vand.u32 %v133, 4294901760
    %v2145 = vsub.f32 %v133, %v2144
    %2146 = vmatpush1.msra.mxu0 %v2145
    %v2147 = vand.u32 %v136, 4294901760
    %v2148 = vsub.f32 %v136, %v2147
    %2149 = vmatprep.subr.mxu0 %v2148
    %v2150 = vand.u32 %v135, 4294901760
    %v2151 = vsub.f32 %v135, %v2150
    %2152 = vmatpush1.msra.mxu0 %v2151
    %v2153 = vand.u32 %v138, 4294901760
    %v2154 = vsub.f32 %v138, %v2153
    %2155 = vmatprep.subr.mxu0 %v2154
    %v2156 = vand.u32 %v137, 4294901760
    %v2157 = vsub.f32 %v137, %v2156
    %2158 = vmatpush1.msra.mxu0 %v2157
    %v2159 = vand.u32 %v140, 4294901760
    %v2160 = vsub.f32 %v140, %v2159
    %2161 = vmatprep.subr.mxu0 %v2160
    %v2162 = vand.u32 %v139, 4294901760
    %v2163 = vsub.f32 %v139, %v2162
    %2164 = vmatpush1.msra.mxu0 %v2163
    %v2165 = vand.u32 %v142, 4294901760
    %v2166 = vsub.f32 %v142, %v2165
    %2167 = vmatprep.subr.mxu0 %v2166
    %v2168 = vand.u32 %v141, 4294901760
    %v2169 = vsub.f32 %v141, %v2168
    %2170 = vmatpush1.msra.mxu0 %v2169
    %v2171 = vand.u32 %v144, 4294901760
    %v2172 = vsub.f32 %v144, %v2171
    %2173 = vmatprep.subr.mxu0 %v2172
    %v2174 = vand.u32 %v143, 4294901760
    %v2175 = vsub.f32 %v143, %v2174
    %2176 = vmatpush1.msra.mxu0 %v2175
    %v2177 = vand.u32 %v146, 4294901760
    %v2178 = vsub.f32 %v146, %v2177
    %2179 = vmatprep.subr.mxu0 %v2178
    %v2180 = vand.u32 %v145, 4294901760
    %v2181 = vsub.f32 %v145, %v2180
    %2182 = vmatpush1.msra.mxu0 %v2181
    %v2183 = vand.u32 %v148, 4294901760
    %v2184 = vsub.f32 %v148, %v2183
    %2185 = vmatprep.subr.mxu0 %v2184
    %v2186 = vand.u32 %v147, 4294901760
    %v2187 = vsub.f32 %v147, %v2186
    %2188 = vmatpush1.msra.mxu0 %v2187
    %v2189 = vand.u32 %v150, 4294901760
    %v2190 = vsub.f32 %v150, %v2189
    %2191 = vmatprep.subr.mxu0 %v2190
    %v2192 = vand.u32 %v149, 4294901760
    %v2193 = vsub.f32 %v149, %v2192
    %2194 = vmatpush1.msra.mxu0 %v2193
    %v2195 = vand.u32 %v152, 4294901760
    %v2196 = vsub.f32 %v152, %v2195
    %2197 = vmatprep.subr.mxu0 %v2196
    %v2198 = vand.u32 %v151, 4294901760
    %v2199 = vsub.f32 %v151, %v2198
    %2200 = vmatpush1.msra.mxu0 %v2199
    %v2201 = vand.u32 %v154, 4294901760
    %v2202 = vsub.f32 %v154, %v2201
    %2203 = vmatprep.subr.mxu0 %v2202
    %v2204 = vand.u32 %v153, 4294901760
    %v2205 = vsub.f32 %v153, %v2204
    %2206 = vmatpush1.msra.mxu0 %v2205
    %v2207 = vand.u32 %v156, 4294901760
    %v2208 = vsub.f32 %v156, %v2207
    %2209 = vmatprep.subr.mxu0 %v2208
    %v2210 = vand.u32 %v155, 4294901760
    %v2211 = vsub.f32 %v155, %v2210
    %2212 = vmatpush1.msra.mxu0 %v2211
    %v2213 = vand.u32 %v158, 4294901760
    %v2214 = vsub.f32 %v158, %v2213
    %2215 = vmatprep.subr.mxu0 %v2214
    %v2216 = vand.u32 %v157, 4294901760
    %v2217 = vsub.f32 %v157, %v2216
    %2218 = vmatpush1.msra.mxu0 %v2217
    %v2219 = vand.u32 %v160, 4294901760
    %v2220 = vsub.f32 %v160, %v2219
    %2221 = vmatprep.subr.mxu0 %v2220
    %v2222 = vand.u32 %v159, 4294901760
    %v2223 = vsub.f32 %v159, %v2222
    %2224 = vmatpush1.msra.mxu0 %v2223
    %v2225 = vand.u32 %v162, 4294901760
    %v2226 = vsub.f32 %v162, %v2225
    %2227 = vmatprep.subr.mxu0 %v2226
    %v2228 = vand.u32 %v161, 4294901760
    %v2229 = vsub.f32 %v161, %v2228
    %2230 = vmatpush1.msra.mxu0 %v2229
    %v2231 = vand.u32 %v164, 4294901760
    %v2232 = vsub.f32 %v164, %v2231
    %2233 = vmatprep.subr.mxu0 %v2232
    %v2234 = vand.u32 %v163, 4294901760
    %v2235 = vsub.f32 %v163, %v2234
    %2236 = vmatpush1.msra.mxu0 %v2235
    %v2237 = vand.u32 %v166, 4294901760
    %v2238 = vsub.f32 %v166, %v2237
    %2239 = vmatprep.subr.mxu0 %v2238
    %v2240 = vand.u32 %v165, 4294901760
    %v2241 = vsub.f32 %v165, %v2240
    %2242 = vmatpush1.msra.mxu0 %v2241
    %v2243 = vand.u32 %v168, 4294901760
    %v2244 = vsub.f32 %v168, %v2243
    %2245 = vmatprep.subr.mxu0 %v2244
    %v2246 = vand.u32 %v167, 4294901760
    %v2247 = vsub.f32 %v167, %v2246
    %2248 = vmatpush1.msra.mxu0 %v2247
    %v2249 = vand.u32 %v170, 4294901760
    %v2250 = vsub.f32 %v170, %v2249
    %2251 = vmatprep.subr.mxu0 %v2250
    %v2252 = vand.u32 %v169, 4294901760
    %v2253 = vsub.f32 %v169, %v2252
    %2254 = vmatpush1.msra.mxu0 %v2253
    %v2255 = vand.u32 %v172, 4294901760
    %v2256 = vsub.f32 %v172, %v2255
    %2257 = vmatprep.subr.mxu0 %v2256
    %v2258 = vand.u32 %v171, 4294901760
    %v2259 = vsub.f32 %v171, %v2258
    %2260 = vmatpush1.msra.mxu0 %v2259
    %v2261 = vand.u32 %v174, 4294901760
    %v2262 = vsub.f32 %v174, %v2261
    %2263 = vmatprep.subr.mxu0 %v2262
    %v2264 = vand.u32 %v173, 4294901760
    %v2265 = vsub.f32 %v173, %v2264
    %2266 = vmatpush1.msra.mxu0 %v2265
    %v2267 = vand.u32 %v176, 4294901760
    %v2268 = vsub.f32 %v176, %v2267
    %2269 = vmatprep.subr.mxu0 %v2268
    %v2270 = vand.u32 %v175, 4294901760
    %v2271 = vsub.f32 %v175, %v2270
    %2272 = vmatpush1.msra.mxu0 %v2271
    %v2273 = vand.u32 %v178, 4294901760
    %v2274 = vsub.f32 %v178, %v2273
    %2275 = vmatprep.subr.mxu0 %v2274
    %v2276 = vand.u32 %v177, 4294901760
    %v2277 = vsub.f32 %v177, %v2276
    %2278 = vmatpush1.msra.mxu0 %v2277
    %v2279 = vand.u32 %v46, 4294901760
    %v2280 = vsub.f32 %v46, %v2279
    %2281 = vmatprep.mubr.f32.mxu0 %v2280
    %v2282 = vand.u32 %v45, 4294901760
    %v2283 = vsub.f32 %v45, %v2282
    %2284 = vmatmul.mubr.f32.gmra.mrb[0].mxu0 %v2283
    %v2285 = vpop.f32.mrb[0].mxu0
    %v2286 = vadd.f32 %v2075, %v2285
    %v2287 = vpop.f32.mrb[0].mxu0
    %v2288 = vadd.f32 %v2077, %v2287
    %v2289 = vand.u32 %v50, 4294901760
    %v2290 = vsub.f32 %v50, %v2289
    %2291 = vmatprep.mubr.f32.mxu0 %v2290
    %v2292 = vand.u32 %v49, 4294901760
    %v2293 = vsub.f32 %v49, %v2292
    %2294 = vmatmul.mubr.f32.gmra.mrb[0].mxu0 %v2293
    %v2295 = vpop.f32.mrb[0].mxu0
    %v2296 = vadd.f32 %v2083, %v2295
    %v2297 = vpop.f32.mrb[0].mxu0
    %v2298 = vadd.f32 %v2085, %v2297
    %2299 = vdwg.mxu0
    %v2300 = vand.u32 %v116, 4294901760
    %2301 = vmatprep.subr.mxu0 %v2300
    %v2302 = vand.u32 %v115, 4294901760
    %2303 = vmatpush1.msra.mxu0 %v2302
    %v2304 = vand.u32 %v118, 4294901760
    %2305 = vmatprep.subr.mxu0 %v2304
    %v2306 = vand.u32 %v117, 4294901760
    %2307 = vmatpush1.msra.mxu0 %v2306
    %v2308 = vand.u32 %v120, 4294901760
    %2309 = vmatprep.subr.mxu0 %v2308
    %v2310 = vand.u32 %v119, 4294901760
    %2311 = vmatpush1.msra.mxu0 %v2310
    %v2312 = vand.u32 %v122, 4294901760
    %2313 = vmatprep.subr.mxu0 %v2312
    %v2314 = vand.u32 %v121, 4294901760
    %2315 = vmatpush1.msra.mxu0 %v2314
    %v2316 = vand.u32 %v124, 4294901760
    %2317 = vmatprep.subr.mxu0 %v2316
    %v2318 = vand.u32 %v123, 4294901760
    %2319 = vmatpush1.msra.mxu0 %v2318
    %v2320 = vand.u32 %v126, 4294901760
    %2321 = vmatprep.subr.mxu0 %v2320
    %v2322 = vand.u32 %v125, 4294901760
    %2323 = vmatpush1.msra.mxu0 %v2322
    %v2324 = vand.u32 %v128, 4294901760
    %2325 = vmatprep.subr.mxu0 %v2324
    %v2326 = vand.u32 %v127, 4294901760
    %2327 = vmatpush1.msra.mxu0 %v2326
    %v2328 = vand.u32 %v130, 4294901760
    %2329 = vmatprep.subr.mxu0 %v2328
    %v2330 = vand.u32 %v129, 4294901760
    %2331 = vmatpush1.msra.mxu0 %v2330
    %v2332 = vand.u32 %v132, 4294901760
    %2333 = vmatprep.subr.mxu0 %v2332
    %v2334 = vand.u32 %v131, 4294901760
    %2335 = vmatpush1.msra.mxu0 %v2334
    %v2336 = vand.u32 %v134, 4294901760
    %2337 = vmatprep.subr.mxu0 %v2336
    %v2338 = vand.u32 %v133, 4294901760
    %2339 = vmatpush1.msra.mxu0 %v2338
    %v2340 = vand.u32 %v136, 4294901760
    %2341 = vmatprep.subr.mxu0 %v2340
    %v2342 = vand.u32 %v135, 4294901760
    %2343 = vmatpush1.msra.mxu0 %v2342
    %v2344 = vand.u32 %v138, 4294901760
    %2345 = vmatprep.subr.mxu0 %v2344
    %v2346 = vand.u32 %v137, 4294901760
    %2347 = vmatpush1.msra.mxu0 %v2346
    %v2348 = vand.u32 %v140, 4294901760
    %2349 = vmatprep.subr.mxu0 %v2348
    %v2350 = vand.u32 %v139, 4294901760
    %2351 = vmatpush1.msra.mxu0 %v2350
    %v2352 = vand.u32 %v142, 4294901760
    %2353 = vmatprep.subr.mxu0 %v2352
    %v2354 = vand.u32 %v141, 4294901760
    %2355 = vmatpush1.msra.mxu0 %v2354
    %v2356 = vand.u32 %v144, 4294901760
    %2357 = vmatprep.subr.mxu0 %v2356
    %v2358 = vand.u32 %v143, 4294901760
    %2359 = vmatpush1.msra.mxu0 %v2358
    %v2360 = vand.u32 %v146, 4294901760
    %2361 = vmatprep.subr.mxu0 %v2360
    %v2362 = vand.u32 %v145, 4294901760
    %2363 = vmatpush1.msra.mxu0 %v2362
    %v2364 = vand.u32 %v148, 4294901760
    %2365 = vmatprep.subr.mxu0 %v2364
    %v2366 = vand.u32 %v147, 4294901760
    %2367 = vmatpush1.msra.mxu0 %v2366
    %v2368 = vand.u32 %v150, 4294901760
    %2369 = vmatprep.subr.mxu0 %v2368
    %v2370 = vand.u32 %v149, 4294901760
    %2371 = vmatpush1.msra.mxu0 %v2370
    %v2372 = vand.u32 %v152, 4294901760
    %2373 = vmatprep.subr.mxu0 %v2372
    %v2374 = vand.u32 %v151, 4294901760
    %2375 = vmatpush1.msra.mxu0 %v2374
    %v2376 = vand.u32 %v154, 4294901760
    %2377 = vmatprep.subr.mxu0 %v2376
    %v2378 = vand.u32 %v153, 4294901760
    %2379 = vmatpush1.msra.mxu0 %v2378
    %v2380 = vand.u32 %v156, 4294901760
    %2381 = vmatprep.subr.mxu0 %v2380
    %v2382 = vand.u32 %v155, 4294901760
    %2383 = vmatpush1.msra.mxu0 %v2382
    %v2384 = vand.u32 %v158, 4294901760
    %2385 = vmatprep.subr.mxu0 %v2384
    %v2386 = vand.u32 %v157, 4294901760
    %2387 = vmatpush1.msra.mxu0 %v2386
    %v2388 = vand.u32 %v160, 4294901760
    %2389 = vmatprep.subr.mxu0 %v2388
    %v2390 = vand.u32 %v159, 4294901760
    %2391 = vmatpush1.msra.mxu0 %v2390
    %v2392 = vand.u32 %v162, 4294901760
    %2393 = vmatprep.subr.mxu0 %v2392
    %v2394 = vand.u32 %v161, 4294901760
    %2395 = vmatpush1.msra.mxu0 %v2394
    %v2396 = vand.u32 %v164, 4294901760
    %2397 = vmatprep.subr.mxu0 %v2396
    %v2398 = vand.u32 %v163, 4294901760
    %2399 = vmatpush1.msra.mxu0 %v2398
    %v2400 = vand.u32 %v166, 4294901760
    %2401 = vmatprep.subr.mxu0 %v2400
    %v2402 = vand.u32 %v165, 4294901760
    %2403 = vmatpush1.msra.mxu0 %v2402
    %v2404 = vand.u32 %v168, 4294901760
    %2405 = vmatprep.subr.mxu0 %v2404
    %v2406 = vand.u32 %v167, 4294901760
    %2407 = vmatpush1.msra.mxu0 %v2406
    %v2408 = vand.u32 %v170, 4294901760
    %2409 = vmatprep.subr.mxu0 %v2408
    %v2410 = vand.u32 %v169, 4294901760
    %2411 = vmatpush1.msra.mxu0 %v2410
    %v2412 = vand.u32 %v172, 4294901760
    %2413 = vmatprep.subr.mxu0 %v2412
    %v2414 = vand.u32 %v171, 4294901760
    %2415 = vmatpush1.msra.mxu0 %v2414
    %v2416 = vand.u32 %v174, 4294901760
    %2417 = vmatprep.subr.mxu0 %v2416
    %v2418 = vand.u32 %v173, 4294901760
    %2419 = vmatpush1.msra.mxu0 %v2418
    %v2420 = vand.u32 %v176, 4294901760
    %2421 = vmatprep.subr.mxu0 %v2420
    %v2422 = vand.u32 %v175, 4294901760
    %2423 = vmatpush1.msra.mxu0 %v2422
    %v2424 = vand.u32 %v178, 4294901760
    %2425 = vmatprep.subr.mxu0 %v2424
    %v2426 = vand.u32 %v177, 4294901760
    %2427 = vmatpush1.msra.mxu0 %v2426
    %v2428 = vand.u32 %v46, 4294901760
    %v2429 = vsub.f32 %v46, %v2428
    %v2430 = vand.u32 %v2429, 4294901760
    %2431 = vmatprep.mubr.f32.mxu0 %v2430
    %v2432 = vand.u32 %v45, 4294901760
    %v2433 = vsub.f32 %v45, %v2432
    %v2434 = vand.u32 %v2433, 4294901760
    %2435 = vmatmul.mubr.f32.gmra.mrb[0].mxu0 %v2434
    %v2436 = vpop.f32.mrb[0].mxu0
    %v2437 = vadd.f32 %v2286, %v2436
    %v2438 = vpop.f32.mrb[0].mxu0
    %v2439 = vadd.f32 %v2288, %v2438
    %v2440 = vand.u32 %v50, 4294901760
    %v2441 = vsub.f32 %v50, %v2440
    %v2442 = vand.u32 %v2441, 4294901760
    %2443 = vmatprep.mubr.f32.mxu0 %v2442
    %v2444 = vand.u32 %v49, 4294901760
    %v2445 = vsub.f32 %v49, %v2444
    %v2446 = vand.u32 %v2445, 4294901760
    %2447 = vmatmul.mubr.f32.gmra.mrb[0].mxu0 %v2446
    %v2448 = vpop.f32.mrb[0].mxu0
    %v2449 = vadd.f32 %v2296, %v2448
    %v2450 = vpop.f32.mrb[0].mxu0
    %v2451 = vadd.f32 %v2298, %v2450
    %2452 = vdwg.mxu0
    %v2453 = vand.u32 %v116, 4294901760
    %v2454 = vsub.f32 %v116, %v2453
    %v2455 = vand.u32 %v2454, 4294901760
    %2456 = vmatprep.subr.mxu0 %v2455
    %v2457 = vand.u32 %v115, 4294901760
    %v2458 = vsub.f32 %v115, %v2457
    %v2459 = vand.u32 %v2458, 4294901760
    %2460 = vmatpush1.msra.mxu0 %v2459
    %v2461 = vand.u32 %v118, 4294901760
    %v2462 = vsub.f32 %v118, %v2461
    %v2463 = vand.u32 %v2462, 4294901760
    %2464 = vmatprep.subr.mxu0 %v2463
    %v2465 = vand.u32 %v117, 4294901760
    %v2466 = vsub.f32 %v117, %v2465
    %v2467 = vand.u32 %v2466, 4294901760
    %2468 = vmatpush1.msra.mxu0 %v2467
    %v2469 = vand.u32 %v120, 4294901760
    %v2470 = vsub.f32 %v120, %v2469
    %v2471 = vand.u32 %v2470, 4294901760
    %2472 = vmatprep.subr.mxu0 %v2471
    %v2473 = vand.u32 %v119, 4294901760
    %v2474 = vsub.f32 %v119, %v2473
    %v2475 = vand.u32 %v2474, 4294901760
    %2476 = vmatpush1.msra.mxu0 %v2475
    %v2477 = vand.u32 %v122, 4294901760
    %v2478 = vsub.f32 %v122, %v2477
    %v2479 = vand.u32 %v2478, 4294901760
    %2480 = vmatprep.subr.mxu0 %v2479
    %v2481 = vand.u32 %v121, 4294901760
    %v2482 = vsub.f32 %v121, %v2481
    %v2483 = vand.u32 %v2482, 4294901760
    %2484 = vmatpush1.msra.mxu0 %v2483
    %v2485 = vand.u32 %v124, 4294901760
    %v2486 = vsub.f32 %v124, %v2485
    %v2487 = vand.u32 %v2486, 4294901760
    %2488 = vmatprep.subr.mxu0 %v2487
    %v2489 = vand.u32 %v123, 4294901760
    %v2490 = vsub.f32 %v123, %v2489
    %v2491 = vand.u32 %v2490, 4294901760
    %2492 = vmatpush1.msra.mxu0 %v2491
    %v2493 = vand.u32 %v126, 4294901760
    %v2494 = vsub.f32 %v126, %v2493
    %v2495 = vand.u32 %v2494, 4294901760
    %2496 = vmatprep.subr.mxu0 %v2495
    %v2497 = vand.u32 %v125, 4294901760
    %v2498 = vsub.f32 %v125, %v2497
    %v2499 = vand.u32 %v2498, 4294901760
    %2500 = vmatpush1.msra.mxu0 %v2499
    %v2501 = vand.u32 %v128, 4294901760
    %v2502 = vsub.f32 %v128, %v2501
    %v2503 = vand.u32 %v2502, 4294901760
    %2504 = vmatprep.subr.mxu0 %v2503
    %v2505 = vand.u32 %v127, 4294901760
    %v2506 = vsub.f32 %v127, %v2505
    %v2507 = vand.u32 %v2506, 4294901760
    %2508 = vmatpush1.msra.mxu0 %v2507
    %v2509 = vand.u32 %v130, 4294901760
    %v2510 = vsub.f32 %v130, %v2509
    %v2511 = vand.u32 %v2510, 4294901760
    %2512 = vmatprep.subr.mxu0 %v2511
    %v2513 = vand.u32 %v129, 4294901760
    %v2514 = vsub.f32 %v129, %v2513
    %v2515 = vand.u32 %v2514, 4294901760
    %2516 = vmatpush1.msra.mxu0 %v2515
    %v2517 = vand.u32 %v132, 4294901760
    %v2518 = vsub.f32 %v132, %v2517
    %v2519 = vand.u32 %v2518, 4294901760
    %2520 = vmatprep.subr.mxu0 %v2519
    %v2521 = vand.u32 %v131, 4294901760
    %v2522 = vsub.f32 %v131, %v2521
    %v2523 = vand.u32 %v2522, 4294901760
    %2524 = vmatpush1.msra.mxu0 %v2523
    %v2525 = vand.u32 %v134, 4294901760
    %v2526 = vsub.f32 %v134, %v2525
    %v2527 = vand.u32 %v2526, 4294901760
    %2528 = vmatprep.subr.mxu0 %v2527
    %v2529 = vand.u32 %v133, 4294901760
    %v2530 = vsub.f32 %v133, %v2529
    %v2531 = vand.u32 %v2530, 4294901760
    %2532 = vmatpush1.msra.mxu0 %v2531
    %v2533 = vand.u32 %v136, 4294901760
    %v2534 = vsub.f32 %v136, %v2533
    %v2535 = vand.u32 %v2534, 4294901760
    %2536 = vmatprep.subr.mxu0 %v2535
    %v2537 = vand.u32 %v135, 4294901760
    %v2538 = vsub.f32 %v135, %v2537
    %v2539 = vand.u32 %v2538, 4294901760
    %2540 = vmatpush1.msra.mxu0 %v2539
    %v2541 = vand.u32 %v138, 4294901760
    %v2542 = vsub.f32 %v138, %v2541
    %v2543 = vand.u32 %v2542, 4294901760
    %2544 = vmatprep.subr.mxu0 %v2543
    %v2545 = vand.u32 %v137, 4294901760
    %v2546 = vsub.f32 %v137, %v2545
    %v2547 = vand.u32 %v2546, 4294901760
    %2548 = vmatpush1.msra.mxu0 %v2547
    %v2549 = vand.u32 %v140, 4294901760
    %v2550 = vsub.f32 %v140, %v2549
    %v2551 = vand.u32 %v2550, 4294901760
    %2552 = vmatprep.subr.mxu0 %v2551
    %v2553 = vand.u32 %v139, 4294901760
    %v2554 = vsub.f32 %v139, %v2553
    %v2555 = vand.u32 %v2554, 4294901760
    %2556 = vmatpush1.msra.mxu0 %v2555
    %v2557 = vand.u32 %v142, 4294901760
    %v2558 = vsub.f32 %v142, %v2557
    %v2559 = vand.u32 %v2558, 4294901760
    %2560 = vmatprep.subr.mxu0 %v2559
    %v2561 = vand.u32 %v141, 4294901760
    %v2562 = vsub.f32 %v141, %v2561
    %v2563 = vand.u32 %v2562, 4294901760
    %2564 = vmatpush1.msra.mxu0 %v2563
    %v2565 = vand.u32 %v144, 4294901760
    %v2566 = vsub.f32 %v144, %v2565
    %v2567 = vand.u32 %v2566, 4294901760
    %2568 = vmatprep.subr.mxu0 %v2567
    %v2569 = vand.u32 %v143, 4294901760
    %v2570 = vsub.f32 %v143, %v2569
    %v2571 = vand.u32 %v2570, 4294901760
    %2572 = vmatpush1.msra.mxu0 %v2571
    %v2573 = vand.u32 %v146, 4294901760
    %v2574 = vsub.f32 %v146, %v2573
    %v2575 = vand.u32 %v2574, 4294901760
    %2576 = vmatprep.subr.mxu0 %v2575
    %v2577 = vand.u32 %v145, 4294901760
    %v2578 = vsub.f32 %v145, %v2577
    %v2579 = vand.u32 %v2578, 4294901760
    %2580 = vmatpush1.msra.mxu0 %v2579
    %v2581 = vand.u32 %v148, 4294901760
    %v2582 = vsub.f32 %v148, %v2581
    %v2583 = vand.u32 %v2582, 4294901760
    %2584 = vmatprep.subr.mxu0 %v2583
    %v2585 = vand.u32 %v147, 4294901760
    %v2586 = vsub.f32 %v147, %v2585
    %v2587 = vand.u32 %v2586, 4294901760
    %2588 = vmatpush1.msra.mxu0 %v2587
    %v2589 = vand.u32 %v150, 4294901760
    %v2590 = vsub.f32 %v150, %v2589
    %v2591 = vand.u32 %v2590, 4294901760
    %2592 = vmatprep.subr.mxu0 %v2591
    %v2593 = vand.u32 %v149, 4294901760
    %v2594 = vsub.f32 %v149, %v2593
    %v2595 = vand.u32 %v2594, 4294901760
    %2596 = vmatpush1.msra.mxu0 %v2595
    %v2597 = vand.u32 %v152, 4294901760
    %v2598 = vsub.f32 %v152, %v2597
    %v2599 = vand.u32 %v2598, 4294901760
    %2600 = vmatprep.subr.mxu0 %v2599
    %v2601 = vand.u32 %v151, 4294901760
    %v2602 = vsub.f32 %v151, %v2601
    %v2603 = vand.u32 %v2602, 4294901760
    %2604 = vmatpush1.msra.mxu0 %v2603
    %v2605 = vand.u32 %v154, 4294901760
    %v2606 = vsub.f32 %v154, %v2605
    %v2607 = vand.u32 %v2606, 4294901760
    %2608 = vmatprep.subr.mxu0 %v2607
    %v2609 = vand.u32 %v153, 4294901760
    %v2610 = vsub.f32 %v153, %v2609
    %v2611 = vand.u32 %v2610, 4294901760
    %2612 = vmatpush1.msra.mxu0 %v2611
    %v2613 = vand.u32 %v156, 4294901760
    %v2614 = vsub.f32 %v156, %v2613
    %v2615 = vand.u32 %v2614, 4294901760
    %2616 = vmatprep.subr.mxu0 %v2615
    %v2617 = vand.u32 %v155, 4294901760
    %v2618 = vsub.f32 %v155, %v2617
    %v2619 = vand.u32 %v2618, 4294901760
    %2620 = vmatpush1.msra.mxu0 %v2619
    %v2621 = vand.u32 %v158, 4294901760
    %v2622 = vsub.f32 %v158, %v2621
    %v2623 = vand.u32 %v2622, 4294901760
    %2624 = vmatprep.subr.mxu0 %v2623
    %v2625 = vand.u32 %v157, 4294901760
    %v2626 = vsub.f32 %v157, %v2625
    %v2627 = vand.u32 %v2626, 4294901760
    %2628 = vmatpush1.msra.mxu0 %v2627
    %v2629 = vand.u32 %v160, 4294901760
    %v2630 = vsub.f32 %v160, %v2629
    %v2631 = vand.u32 %v2630, 4294901760
    %2632 = vmatprep.subr.mxu0 %v2631
    %v2633 = vand.u32 %v159, 4294901760
    %v2634 = vsub.f32 %v159, %v2633
    %v2635 = vand.u32 %v2634, 4294901760
    %2636 = vmatpush1.msra.mxu0 %v2635
    %v2637 = vand.u32 %v162, 4294901760
    %v2638 = vsub.f32 %v162, %v2637
    %v2639 = vand.u32 %v2638, 4294901760
    %2640 = vmatprep.subr.mxu0 %v2639
    %v2641 = vand.u32 %v161, 4294901760
    %v2642 = vsub.f32 %v161, %v2641
    %v2643 = vand.u32 %v2642, 4294901760
    %2644 = vmatpush1.msra.mxu0 %v2643
    %v2645 = vand.u32 %v164, 4294901760
    %v2646 = vsub.f32 %v164, %v2645
    %v2647 = vand.u32 %v2646, 4294901760
    %2648 = vmatprep.subr.mxu0 %v2647
    %v2649 = vand.u32 %v163, 4294901760
    %v2650 = vsub.f32 %v163, %v2649
    %v2651 = vand.u32 %v2650, 4294901760
    %2652 = vmatpush1.msra.mxu0 %v2651
    %v2653 = vand.u32 %v166, 4294901760
    %v2654 = vsub.f32 %v166, %v2653
    %v2655 = vand.u32 %v2654, 4294901760
    %2656 = vmatprep.subr.mxu0 %v2655
    %v2657 = vand.u32 %v165, 4294901760
    %v2658 = vsub.f32 %v165, %v2657
    %v2659 = vand.u32 %v2658, 4294901760
    %2660 = vmatpush1.msra.mxu0 %v2659
    %v2661 = vand.u32 %v168, 4294901760
    %v2662 = vsub.f32 %v168, %v2661
    %v2663 = vand.u32 %v2662, 4294901760
    %2664 = vmatprep.subr.mxu0 %v2663
    %v2665 = vand.u32 %v167, 4294901760
    %v2666 = vsub.f32 %v167, %v2665
    %v2667 = vand.u32 %v2666, 4294901760
    %2668 = vmatpush1.msra.mxu0 %v2667
    %v2669 = vand.u32 %v170, 4294901760
    %v2670 = vsub.f32 %v170, %v2669
    %v2671 = vand.u32 %v2670, 4294901760
    %2672 = vmatprep.subr.mxu0 %v2671
    %v2673 = vand.u32 %v169, 4294901760
    %v2674 = vsub.f32 %v169, %v2673
    %v2675 = vand.u32 %v2674, 4294901760
    %2676 = vmatpush1.msra.mxu0 %v2675
    %v2677 = vand.u32 %v172, 4294901760
    %v2678 = vsub.f32 %v172, %v2677
    %v2679 = vand.u32 %v2678, 4294901760
    %2680 = vmatprep.subr.mxu0 %v2679
    %v2681 = vand.u32 %v171, 4294901760
    %v2682 = vsub.f32 %v171, %v2681
    %v2683 = vand.u32 %v2682, 4294901760
    %2684 = vmatpush1.msra.mxu0 %v2683
    %v2685 = vand.u32 %v174, 4294901760
    %v2686 = vsub.f32 %v174, %v2685
    %v2687 = vand.u32 %v2686, 4294901760
    %2688 = vmatprep.subr.mxu0 %v2687
    %v2689 = vand.u32 %v173, 4294901760
    %v2690 = vsub.f32 %v173, %v2689
    %v2691 = vand.u32 %v2690, 4294901760
    %2692 = vmatpush1.msra.mxu0 %v2691
    %v2693 = vand.u32 %v176, 4294901760
    %v2694 = vsub.f32 %v176, %v2693
    %v2695 = vand.u32 %v2694, 4294901760
    %2696 = vmatprep.subr.mxu0 %v2695
    %v2697 = vand.u32 %v175, 4294901760
    %v2698 = vsub.f32 %v175, %v2697
    %v2699 = vand.u32 %v2698, 4294901760
    %2700 = vmatpush1.msra.mxu0 %v2699
    %v2701 = vand.u32 %v178, 4294901760
    %v2702 = vsub.f32 %v178, %v2701
    %v2703 = vand.u32 %v2702, 4294901760
    %2704 = vmatprep.subr.mxu0 %v2703
    %v2705 = vand.u32 %v177, 4294901760
    %v2706 = vsub.f32 %v177, %v2705
    %v2707 = vand.u32 %v2706, 4294901760
    %2708 = vmatpush1.msra.mxu0 %v2707
    %v2709 = vand.u32 %v46, 4294901760
    %2710 = vmatprep.mubr.f32.mxu0 %v2709
    %v2711 = vand.u32 %v45, 4294901760
    %2712 = vmatmul.mubr.f32.gmra.mrb[0].mxu0 %v2711
    %v2713 = vpop.f32.mrb[0].mxu0
    %v2714 = vadd.f32 %v2437, %v2713
    %v2715 = vpop.f32.mrb[0].mxu0
    %v2716 = vadd.f32 %v2439, %v2715
    %v2717 = vand.u32 %v50, 4294901760
    %2718 = vmatprep.mubr.f32.mxu0 %v2717
    %v2719 = vand.u32 %v49, 4294901760
    %2720 = vmatmul.mubr.f32.gmra.mrb[0].mxu0 %v2719
    %v2721 = vpop.f32.mrb[0].mxu0
    %v2722 = vadd.f32 %v2449, %v2721
    %v2723 = vpop.f32.mrb[0].mxu0
    %v2724 = vadd.f32 %v2451, %v2723
    %2725 = vdwg.mxu0
    %v2726 = vand.u32 %v116, 4294901760
    %2727 = vmatprep.subr.mxu0 %v2726
    %v2728 = vand.u32 %v115, 4294901760
    %2729 = vmatpush1.msra.mxu0 %v2728
    %v2730 = vand.u32 %v118, 4294901760
    %2731 = vmatprep.subr.mxu0 %v2730
    %v2732 = vand.u32 %v117, 4294901760
    %2733 = vmatpush1.msra.mxu0 %v2732
    %v2734 = vand.u32 %v120, 4294901760
    %2735 = vmatprep.subr.mxu0 %v2734
    %v2736 = vand.u32 %v119, 4294901760
    %2737 = vmatpush1.msra.mxu0 %v2736
    %v2738 = vand.u32 %v122, 4294901760
    %2739 = vmatprep.subr.mxu0 %v2738
    %v2740 = vand.u32 %v121, 4294901760
    %2741 = vmatpush1.msra.mxu0 %v2740
    %v2742 = vand.u32 %v124, 4294901760
    %2743 = vmatprep.subr.mxu0 %v2742
    %v2744 = vand.u32 %v123, 4294901760
    %2745 = vmatpush1.msra.mxu0 %v2744
    %v2746 = vand.u32 %v126, 4294901760
    %2747 = vmatprep.subr.mxu0 %v2746
    %v2748 = vand.u32 %v125, 4294901760
    %2749 = vmatpush1.msra.mxu0 %v2748
    %v2750 = vand.u32 %v128, 4294901760
    %2751 = vmatprep.subr.mxu0 %v2750
    %v2752 = vand.u32 %v127, 4294901760
    %2753 = vmatpush1.msra.mxu0 %v2752
    %v2754 = vand.u32 %v130, 4294901760
    %2755 = vmatprep.subr.mxu0 %v2754
    %v2756 = vand.u32 %v129, 4294901760
    %2757 = vmatpush1.msra.mxu0 %v2756
    %v2758 = vand.u32 %v132, 4294901760
    %2759 = vmatprep.subr.mxu0 %v2758
    %v2760 = vand.u32 %v131, 4294901760
    %2761 = vmatpush1.msra.mxu0 %v2760
    %v2762 = vand.u32 %v134, 4294901760
    %2763 = vmatprep.subr.mxu0 %v2762
    %v2764 = vand.u32 %v133, 4294901760
    %2765 = vmatpush1.msra.mxu0 %v2764
    %v2766 = vand.u32 %v136, 4294901760
    %2767 = vmatprep.subr.mxu0 %v2766
    %v2768 = vand.u32 %v135, 4294901760
    %2769 = vmatpush1.msra.mxu0 %v2768
    %v2770 = vand.u32 %v138, 4294901760
    %2771 = vmatprep.subr.mxu0 %v2770
    %v2772 = vand.u32 %v137, 4294901760
    %2773 = vmatpush1.msra.mxu0 %v2772
    %v2774 = vand.u32 %v140, 4294901760
    %2775 = vmatprep.subr.mxu0 %v2774
    %v2776 = vand.u32 %v139, 4294901760
    %2777 = vmatpush1.msra.mxu0 %v2776
    %v2778 = vand.u32 %v142, 4294901760
    %2779 = vmatprep.subr.mxu0 %v2778
    %v2780 = vand.u32 %v141, 4294901760
    %2781 = vmatpush1.msra.mxu0 %v2780
    %v2782 = vand.u32 %v144, 4294901760
    %2783 = vmatprep.subr.mxu0 %v2782
    %v2784 = vand.u32 %v143, 4294901760
    %2785 = vmatpush1.msra.mxu0 %v2784
    %v2786 = vand.u32 %v146, 4294901760
    %2787 = vmatprep.subr.mxu0 %v2786
    %v2788 = vand.u32 %v145, 4294901760
    %2789 = vmatpush1.msra.mxu0 %v2788
    %v2790 = vand.u32 %v148, 4294901760
    %2791 = vmatprep.subr.mxu0 %v2790
    %v2792 = vand.u32 %v147, 4294901760
    %2793 = vmatpush1.msra.mxu0 %v2792
    %v2794 = vand.u32 %v150, 4294901760
    %2795 = vmatprep.subr.mxu0 %v2794
    %v2796 = vand.u32 %v149, 4294901760
    %2797 = vmatpush1.msra.mxu0 %v2796
    %v2798 = vand.u32 %v152, 4294901760
    %2799 = vmatprep.subr.mxu0 %v2798
    %v2800 = vand.u32 %v151, 4294901760
    %2801 = vmatpush1.msra.mxu0 %v2800
    %v2802 = vand.u32 %v154, 4294901760
    %2803 = vmatprep.subr.mxu0 %v2802
    %v2804 = vand.u32 %v153, 4294901760
    %2805 = vmatpush1.msra.mxu0 %v2804
    %v2806 = vand.u32 %v156, 4294901760
    %2807 = vmatprep.subr.mxu0 %v2806
    %v2808 = vand.u32 %v155, 4294901760
    %2809 = vmatpush1.msra.mxu0 %v2808
    %v2810 = vand.u32 %v158, 4294901760
    %2811 = vmatprep.subr.mxu0 %v2810
    %v2812 = vand.u32 %v157, 4294901760
    %2813 = vmatpush1.msra.mxu0 %v2812
    %v2814 = vand.u32 %v160, 4294901760
    %2815 = vmatprep.subr.mxu0 %v2814
    %v2816 = vand.u32 %v159, 4294901760
    %2817 = vmatpush1.msra.mxu0 %v2816
    %v2818 = vand.u32 %v162, 4294901760
    %2819 = vmatprep.subr.mxu0 %v2818
    %v2820 = vand.u32 %v161, 4294901760
    %2821 = vmatpush1.msra.mxu0 %v2820
    %v2822 = vand.u32 %v164, 4294901760
    %2823 = vmatprep.subr.mxu0 %v2822
    %v2824 = vand.u32 %v163, 4294901760
    %2825 = vmatpush1.msra.mxu0 %v2824
    %v2826 = vand.u32 %v166, 4294901760
    %2827 = vmatprep.subr.mxu0 %v2826
    %v2828 = vand.u32 %v165, 4294901760
    %2829 = vmatpush1.msra.mxu0 %v2828
    %v2830 = vand.u32 %v168, 4294901760
    %2831 = vmatprep.subr.mxu0 %v2830
    %v2832 = vand.u32 %v167, 4294901760
    %2833 = vmatpush1.msra.mxu0 %v2832
    %v2834 = vand.u32 %v170, 4294901760
    %2835 = vmatprep.subr.mxu0 %v2834
    %v2836 = vand.u32 %v169, 4294901760
    %2837 = vmatpush1.msra.mxu0 %v2836
    %v2838 = vand.u32 %v172, 4294901760
    %2839 = vmatprep.subr.mxu0 %v2838
    %v2840 = vand.u32 %v171, 4294901760
    %2841 = vmatpush1.msra.mxu0 %v2840
    %v2842 = vand.u32 %v174, 4294901760
    %2843 = vmatprep.subr.mxu0 %v2842
    %v2844 = vand.u32 %v173, 4294901760
    %2845 = vmatpush1.msra.mxu0 %v2844
    %v2846 = vand.u32 %v176, 4294901760
    %2847 = vmatprep.subr.mxu0 %v2846
    %v2848 = vand.u32 %v175, 4294901760
    %2849 = vmatpush1.msra.mxu0 %v2848
    %v2850 = vand.u32 %v178, 4294901760
    %2851 = vmatprep.subr.mxu0 %v2850
    %v2852 = vand.u32 %v177, 4294901760
    %2853 = vmatpush1.msra.mxu0 %v2852
    %v2854 = vand.u32 %v46, 4294901760
    %2855 = vmatprep.mubr.f32.mxu0 %v2854
    %v2856 = vand.u32 %v45, 4294901760
    %2857 = vmatmul.mubr.f32.gmra.mrb[0].mxu0 %v2856
    %v2858 = vpop.f32.mrb[0].mxu0
    %v2859 = vadd.f32 %v2714, %v2858
    %v2860 = vpop.f32.mrb[0].mxu0
    %v2861 = vadd.f32 %v2716, %v2860
    %v2862 = vand.u32 %v50, 4294901760
    %2863 = vmatprep.mubr.f32.mxu0 %v2862
    %v2864 = vand.u32 %v49, 4294901760
    %2865 = vmatmul.mubr.f32.gmra.mrb[0].mxu0 %v2864
    %v2866 = vpop.f32.mrb[0].mxu0
    %v2867 = vadd.f32 %v2722, %v2866
    %v2868 = vpop.f32.mrb[0].mxu0
    %v2869 = vadd.f32 %v2724, %v2868
    %2870 = vdwg.mxu0
    %v2871 = vmax.f32 %v2859, 0.0
    %v2872 = vmax.f32 %v2867, 0.0
    %2873 = vst [vmem:[#allocation7] sm:$0xff] %v2871
    %2874 = vst [vmem:[#allocation7 + $0x8] sm:$0xff] %v2872
    %v2875 = vmax.f32 %v2861, 0.0
    %v2876 = vmax.f32 %v2869, 0.0
    %2877 = vst [vmem:[#allocation8] sm:$0xff] %v2875
    %2878 = vst [vmem:[#allocation8 + $0x8] sm:$0xff] %v2876
    // Predicated region
    $region18: #{tpu_custom_call.1} parent=1 // pred_check
      _
    $region19: #{tpu_custom_call.1} parent=1 // pred_check_branch
      %2880 = sbr.rel (0) target = $region21
    $region20: #{tpu_custom_call.1} parent=1 // pred_region
      %s2882 = ssub.s32 256, 256
      %2883 = vsyncadd [#allocation4], %s2882
      %s2884 = sshll.u32 [#allocation7], 4
      %s2885 = int_to_ptr.vmem [resolvable:$true] %s2884
      %2890 = dma.vmem_to_hbm [thread:$0]  %s2885, 256, %s2, [#allocation4], 128, 128, 8
    $region21: #{tpu_custom_call.1} parent=1 // pred_fallthru
      _
    // Predicated region
    $region22: #{tpu_custom_call.1} parent=1 // pred_check
      _
    $region23: #{tpu_custom_call.1} parent=1 // pred_check_branch
      %2892 = sbr.rel (0) target = $region25
    $region24: #{tpu_custom_call.1} parent=1 // pred_region
      %s2894 = ssub.s32 256, 256
      %2895 = vsyncadd [#allocation9], %s2894
      %s2896 = sshll.u32 [#allocation8], 4
      %s2897 = int_to_ptr.vmem [resolvable:$true] %s2896
      %2902 = dma.vmem_to_hbm [thread:$0]  %s2897, 256, %s3, [#allocation9], 128, 128, 8
    $region25: #{tpu_custom_call.1} parent=1 // pred_fallthru
      _
    // Predicated region
    $region26: #{tpu_custom_call.1} parent=1 // pred_check
      _
    $region27: #{tpu_custom_call.1} parent=1 // pred_check_branch
      %2904 = sbr.rel (0) target = $region29
    $region28: #{tpu_custom_call.1} parent=1 // pred_region
      %2905 = dma.done [#allocation4], 256
    $region29: #{tpu_custom_call.1} parent=1 // pred_fallthru
      _
    // Predicated region
    $region30: #{tpu_custom_call.1} parent=1 // pred_check
      _
    $region31: #{tpu_custom_call.1} parent=1 // pred_check_branch
      %2907 = sbr.rel (0) target = $region33
    $region32: #{tpu_custom_call.1} parent=1 // pred_region
      %2908 = dma.done [#allocation9], 256
    $region33: #{tpu_custom_call.1} parent=1 // pred_fallthru
      _
    %2909 = vsyncpa [#allocation3], 1
    %2910 = vsyncpa [#allocation6], 1
    %2911 = vsyncpa [#allocation4], 1
    %2912 = vsyncpa [#allocation9], 1

</llo_original>
